<compile_context>
chip_gen: v6e
topology: v6e:2x2x1
jax: 0.10.0
libtpu: 0.0.40
codegen_flags: <defaults>
</compile_context>

<pallas_src>
import functools

import jax
import jax.numpy as jnp
from jax.experimental import pallas as pl
from jax.experimental.pallas import tpu as pltpu


# ----------------------------------------------------------------------------
# small helpers
# ----------------------------------------------------------------------------
def _round_up(x, m):
    return ((x + m - 1) // m) * m


def _pad2d(x, M, N):
    m, n = x.shape
    if m == M and n == N:
        return x
    return jnp.pad(x, ((0, M - m), (0, N - n)))


def _pad1d(x, N):
    n = x.shape[0]
    if n == N:
        return x
    return jnp.pad(x, (0, N - n))


def _pick_tile_lane(dim, pref):
    """Tile for a K/N (lane) dim: multiple of 128; prefer a tile that divides
    the 128-aligned dim so no dead padding work is done (768 -> 384, 3072 -> 512)."""
    if dim <= 128:
        return 128
    if dim <= pref and dim % 128 == 0:
        return dim
    dim_r = _round_up(dim, 128)
    for cand in range(min(pref, dim_r), 127, -128):
        if dim_r % cand == 0:
            return cand
    return min(pref, dim_r)


def _pick_tile_row(dim, pref):
    """Tile for the M (sublane) dim: multiple of 8; prefer dividing the dim."""
    if dim <= pref:
        return _round_up(dim, 8)
    dim_r = _round_up(dim, 8)
    for cand in range(pref, 7, -8):
        if dim_r % cand == 0:
            return cand
    return pref


# <= 48 MiB: safe on v7x (64 MiB/TC) and leaves headroom on v5e/v6e (128 MiB).
_VMEM_LIMIT = 48 * 1024 * 1024


# ----------------------------------------------------------------------------
# Pallas kernels
# ----------------------------------------------------------------------------
def _linear_kernel(x_ref, w_ref, b_ref, o_ref, acc_ref, *, activation):
    """Tiled bf16 matmul, f32 accumulation; bias/activation in the finalize."""
    @pl.when(pl.program_id(2) == 0)
    def _():
        acc_ref[...] = jnp.zeros_like(acc_ref)

    acc_ref[...] += jnp.dot(
        x_ref[...], w_ref[...], preferred_element_type=jnp.float32
    )

    @pl.when(pl.program_id(2) == pl.num_programs(2) - 1)
    def _():
        y = acc_ref[...] + b_ref[...]
        if activation == "gelu":
            # NOTE: tanh-approx gelu (HF BERT uses exact erf gelu) -- documented
            # numeric divergence, kept for robust Mosaic lowering.
            y = jax.nn.gelu(y)
        o_ref[...] = y.astype(o_ref.dtype)


def pallas_linear(x, w, b, activation=None, out_dtype=jnp.bfloat16,
                  tm=512, tn=512, tk=512):
    """y = act(x @ w + b); x: [M, K], w: [K, N], b: [N] -> [M, N].

    x/w are cast to bf16 (f32 MXU accumulation). M/K/N are padded only as far
    as (8,128) alignment requires; tiles are chosen to divide the aligned dims
    so 768-sized projections carry no dead FLOPs. Padding is zero => exact.
    """
    M, K = x.shape
    N = w.shape[1]

    tm = _pick_tile_row(M, tm)
    tk = _pick_tile_lane(K, tk)
    tn = _pick_tile_lane(N, tn)
    Mp, Kp, Np = _round_up(M, tm), _round_up(K, tk), _round_up(N, tn)

    xp = _pad2d(x, Mp, Kp).astype(jnp.bfloat16)
    wp = _pad2d(w, Kp, Np).astype(jnp.bfloat16)
    bp = _pad1d(b, Np).astype(jnp.float32).reshape(1, Np)

    kern = functools.partial(_linear_kernel, activation=activation)
    out = pl.pallas_call(
        kern,
        out_shape=jax.ShapeDtypeStruct((Mp, Np), out_dtype),
        grid=(Mp // tm, Np // tn, Kp // tk),
        in_specs=[
            pl.BlockSpec((tm, tk), lambda i, j, k: (i, k)),
            pl.BlockSpec((tk, tn), lambda i, j, k: (k, j)),
            pl.BlockSpec((1, tn), lambda i, j, k: (0, j)),
        ],
        out_specs=pl.BlockSpec((tm, tn), lambda i, j, k: (i, j)),
        scratch_shapes=[pltpu.VMEM((tm, tn), jnp.float32)],
        compiler_params=pltpu.CompilerParams(
            dimension_semantics=("parallel", "parallel", "arbitrary"),
            vmem_limit_bytes=_VMEM_LIMIT,
        ),
    )(xp, wp, bp)

    if (Mp, Np) != (M, N):
        out = out[:M, :N]
    return out


def _layernorm_kernel(*refs, eps, has_residual):
    if has_residual:
        x_ref, r_ref, g_ref, b_ref, o_ref = refs
        x = x_ref[...].astype(jnp.float32) + r_ref[...].astype(jnp.float32)
    else:
        x_ref, g_ref, b_ref, o_ref = refs
        x = x_ref[...].astype(jnp.float32)
    mu = jnp.mean(x, axis=-1, keepdims=True)
    var = jnp.mean((x - mu) ** 2, axis=-1, keepdims=True)
    y = (x - mu) * jax.lax.rsqrt(var + eps)
    o_ref[...] = (y * g_ref[...] + b_ref[...]).astype(o_ref.dtype)


def pallas_layernorm(x, gamma, beta, residual=None, eps=1e-12,
                     out_dtype=jnp.bfloat16, tm=512):
    """LayerNorm over last dim of [M, H] (f32 math, bf16 I/O); fuses x+residual."""
    M, H = x.shape
    tm = _pick_tile_row(M, tm)
    Mp = _round_up(M, tm)

    args = [_pad2d(x, Mp, H)]
    in_specs = [pl.BlockSpec((tm, H), lambda i: (i, 0))]
    if residual is not None:
        args.append(_pad2d(residual, Mp, H))
        in_specs.append(pl.BlockSpec((tm, H), lambda i: (i, 0)))
    args += [gamma.astype(jnp.float32).reshape(1, H),
             beta.astype(jnp.float32).reshape(1, H)]
    in_specs += [
        pl.BlockSpec((1, H), lambda i: (0, 0)),
        pl.BlockSpec((1, H), lambda i: (0, 0)),
    ]

    kern = functools.partial(
        _layernorm_kernel, eps=eps, has_residual=residual is not None
    )
    out = pl.pallas_call(
        kern,
        out_shape=jax.ShapeDtypeStruct((Mp, H), out_dtype),
        grid=(Mp // tm,),
        in_specs=in_specs,
        out_specs=pl.BlockSpec((tm, H), lambda i: (i, 0)),
        compiler_params=pltpu.CompilerParams(
            dimension_semantics=("parallel",),
            vmem_limit_bytes=_VMEM_LIMIT,
        ),
    )(*args)

    if Mp != M:
        out = out[:M]
    return out


def _attention_kernel(qkv_ref, bias_ref, o_ref, *, n_heads, d_head):
    """Fused-head attention for one batch element.

    Consumes the flat fused [S, 3H] qkv slab (bf16), slices head columns
    in-kernel, and writes a single lane-dense [S, H] context block.
    1/sqrt(d_head) is already folded into the Q projection weights.
    """
    H = n_heads * d_head
    qkv = qkv_ref[0]                       # [S, 3H] bf16
    bias = bias_ref[0]                     # [1, S]  f32 additive mask row

    outs = []
    for h in range(n_heads):
        q = qkv[:, h * d_head:(h + 1) * d_head]                # [S, dH] bf16
        k = qkv[:, H + h * d_head:H + (h + 1) * d_head]        # [S, dH] bf16
        v = qkv[:, 2 * H + h * d_head:2 * H + (h + 1) * d_head]
        # q @ k^T via dot_general (contract over dH), f32 accumulation.
        s = jax.lax.dot_general(q, k, (((1,), (1,)), ((), ())),
                                preferred_element_type=jnp.float32)  # [S, S]
        s = s + bias
        s = s - jnp.max(s, axis=-1, keepdims=True)
        p = jnp.exp(s)
        p = p * pl.reciprocal(jnp.sum(p, axis=-1, keepdims=True), approx=True)
        o = jnp.dot(p.astype(jnp.bfloat16), v,
                    preferred_element_type=jnp.float32)              # [S, dH]
        outs.append(o)

    # single lane-dense [S, H] store (no sub-128 masked stores)
    o_ref[0] = jnp.concatenate(outs, axis=-1).astype(o_ref.dtype)


def pallas_attention(qkv, attn_bias_row, n_heads, d_head):
    """qkv: [B, S, 3H] bf16 fused slab; attn_bias_row: [B, 1, S] additive mask."""
    B, S, H3 = qkv.shape
    H = n_heads * d_head
    # TODO(synk): for long S a flash-style (B, q_tiles, kv_tiles) blocking with
    # online softmax would bound the [S,S] score slab and improve pipelining;
    # grid=(B,) is kept here for the short prompt+text sequences of this task.
    kern = functools.partial(_attention_kernel, n_heads=n_heads, d_head=d_head)
    return pl.pallas_call(
        kern,
        out_shape=jax.ShapeDtypeStruct((B, S, H), jnp.bfloat16),
        grid=(B,),
        in_specs=[
            pl.BlockSpec((1, S, H3), lambda b: (b, 0, 0)),
            pl.BlockSpec((1, 1, S), lambda b: (b, 0, 0)),
        ],
        out_specs=pl.BlockSpec((1, S, H), lambda b: (b, 0, 0)),
        compiler_params=pltpu.CompilerParams(
            dimension_semantics=("parallel",),
            vmem_limit_bytes=_VMEM_LIMIT,
        ),
    )(qkv, attn_bias_row)


# ----------------------------------------------------------------------------
# Synthetic BERT-for-MaskedLM built from the kernels above (JAX glue)
# ----------------------------------------------------------------------------
def bert_layer(x, p, attn_bias_row, n_heads):
    B, S, H = x.shape
    d_head = H // n_heads
    xf = x.reshape(B * S, H)

    # fused Q/K/V projection: one [M,H] x [H,3H] bf16 matmul; the slab goes
    # straight to the attention kernel (no reshape/transpose to heads in XLA).
    qkv = pallas_linear(xf, p["wqkv"], p["bqkv"])                   # [M, 3H]
    ctx = pallas_attention(qkv.reshape(B, S, 3 * H), attn_bias_row,
                           n_heads, d_head)                          # [B, S, H]
    ctx = ctx.reshape(B * S, H)

    attn_out = pallas_linear(ctx, p["wo"], p["bo"])
    x1 = pallas_layernorm(attn_out, p["ln1_g"], p["ln1_b"], residual=xf)

    h = pallas_linear(x1, p["w1"], p["b1"], activation="gelu")
    ffn_out = pallas_linear(h, p["w2"], p["b2"])
    x2 = pallas_layernorm(ffn_out, p["ln2_g"], p["ln2_b"], residual=x1)
    return x2.reshape(B, S, H)


def embeddings(params, input_ids, prompt_len):
    B, S_txt = input_ids.shape
    H = params["word_emb"].shape[1]
    word = jnp.take(params["word_emb"], input_ids, axis=0)           # [B, S_txt, H]
    prompt = jnp.broadcast_to(params["prompt_emb"][None], (B, prompt_len, H))
    x = jnp.concatenate([prompt, word], axis=1)                      # [B, S, H]
    S = x.shape[1]
    x = x + params["pos_emb"][:S][None] + params["type_emb"][0][None, None]
    xf = pallas_layernorm(x.reshape(B * S, H),
                          params["emb_ln_g"], params["emb_ln_b"])
    return xf.reshape(B, S, H)


def mlm_verbalizer_scores(params, x0, verbalizer_ids):
    """BertLMPredictionHead restricted to sequence position 0 and the
    verbalizer columns: decoder weight tied to word_emb => gather 2 rows
    (no full [V,H] transpose, no full-vocab logits)."""
    h = pallas_linear(x0, params["mlm_w"], params["mlm_b"], activation="gelu")
    h = pallas_layernorm(h, params["mlm_ln_g"], params["mlm_ln_b"])
    dec_w = jnp.take(params["word_emb"], verbalizer_ids, axis=0).T    # [H, n_verb]
    dec_b = jnp.take(params["decoder_b"], verbalizer_ids, axis=0)     # [n_verb]
    score = pallas_linear(h, dec_w, dec_b, out_dtype=jnp.float32)     # [B, n_verb]
    return score


@functools.partial(jax.jit, static_argnames=("prompt_len", "n_heads"))
def _prompt_bert_core(params, input_ids, attention_mask, label,
                      prompt_len, n_heads):
    # TODO(synk): encoder.set_perturbation_mask / activation_states have no
    # clean Pallas equivalent (HF-internal hooks); perturbation_mask is ignored.
    B, S_txt = input_ids.shape

    # prompt positions are always attended; pass a [B,1,S] additive bias ROW
    # (broadcast inside the attention kernel, not a [B,S,S] slab per head).
    full_mask = jnp.concatenate(
        [jnp.ones((B, prompt_len), jnp.float32),
         attention_mask.astype(jnp.float32)], axis=1)
    attn_bias_row = ((1.0 - full_mask) * -1e9)[:, None, :]            # [B, 1, S]

    x = embeddings(params, input_ids, prompt_len)
    for layer_p in params["layers"]:
        x = bert_layer(x, layer_p, attn_bias_row, n_heads)

    # logits[:, 0] only -> MLM head on [B, H], verbalizer columns only.
    x0 = x[:, 0]                                                      # [B, H]
    V = params["word_emb"].shape[0]
    # default / NLI-style branch: verbalizers "no"(2053) and "yes"(2748);
    # folded into the synthetic vocabulary (real BERT vocab not loaded here).
    no_id, yes_id = 2053 % V, 2748 % V
    verb_ids = jnp.array([no_id, yes_id], dtype=jnp.int32)
    score = mlm_verbalizer_scores(params, x0, verb_ids)               # [B, 2]

    # CrossEntropyLoss + accuracy counts (tiny [B,2] tail kept as plain JAX)
    logp = jax.nn.log_softmax(score, axis=-1)
    loss = -jnp.mean(logp[jnp.arange(B), label])
    predict = jnp.argmax(score, axis=1)
    right = jnp.sum((predict == label).astype(jnp.int32))
    return loss, score, right


def prompt_bert_forward(params, input_ids, attention_mask, label,
                        prompt_len, n_heads, acc_result=None):
    loss, score, right = _prompt_bert_core(
        params, input_ids, attention_mask, label, prompt_len, n_heads)
    if acc_result is None:
        acc_result = {"total": 0, "right": 0}
    # keep counts as device scalars: no host int() sync in the hot path
    acc_result = {"total": acc_result["total"] + input_ids.shape[0],
                  "right": acc_result["right"] + right}
    return {"loss": loss, "acc_result": acc_result, "score": score}


# ----------------------------------------------------------------------------
# Deterministic parameter init
# ----------------------------------------------------------------------------
def init_params(key, vocab, max_pos, hidden, ffn, n_layers, prompt_len, n_heads):
    keys = iter(jax.random.split(key, 128))
    n = lambda *s: (0.02 * jax.random.normal(next(keys), s)).astype(jnp.float32)
    z = lambda *s: jnp.zeros(s, jnp.float32)
    o = lambda *s: jnp.ones(s, jnp.float32)
    bf = jnp.bfloat16

    params = {
        "word_emb": n(vocab, hidden),
        "pos_emb": n(max_pos, hidden),
        "type_emb": n(2, hidden),
        "prompt_emb": n(prompt_len, hidden),
        "emb_ln_g": o(hidden), "emb_ln_b": z(hidden),
        "mlm_w": n(hidden, hidden).astype(bf), "mlm_b": z(hidden),
        "mlm_ln_g": o(hidden), "mlm_ln_b": z(hidden),
        "decoder_b": z(vocab),
        "layers": [],
    }

    d_head = hidden // n_heads
    q_scale = 1.0 / (d_head ** 0.5)
    for _ in range(n_layers):
        wqkv = n(hidden, 3 * hidden)
        bqkv = z(3 * hidden)
        # fold the attention 1/sqrt(d_head) scale into the Q projection
        # (removes a per-step VPU multiply; matters most on v5e)
        wqkv = wqkv.at[:, :hidden].multiply(q_scale)
        bqkv = bqkv.at[:hidden].multiply(q_scale)
        params["layers"].append({
            "wqkv": wqkv.astype(bf), "bqkv": bqkv,
            "wo": n(hidden, hidden).astype(bf), "bo": z(hidden),
            "ln1_g": o(hidden), "ln1_b": z(hidden),
            "w1": n(hidden, ffn).astype(bf), "b1": z(ffn),
            "w2": n(ffn, hidden).astype(bf), "b2": z(hidden),
            "ln2_g": o(hidden), "ln2_b": z(hidden),
        })
    return params


# ----------------------------------------------------------------------------
if __name__ == "__main__":
    B, S_TXT, PROMPT_LEN = 2, 4, 4          # total seq S = 8
    HIDDEN, N_HEADS, FFN = 32, 2, 64
    VOCAB, MAX_POS, N_LAYERS = 128, 16, 2

    key = jax.random.PRNGKey(0)
    k_p, k_ids, k_lbl = jax.random.split(key, 3)

    params = init_params(k_p, VOCAB, MAX_POS, HIDDEN, FFN, N_LAYERS,
                         PROMPT_LEN, N_HEADS)
    input_ids = jax.random.randint(k_ids, (B, S_TXT), 0, VOCAB, dtype=jnp.int32)
    attention_mask = jnp.ones((B, S_TXT), jnp.int32)
    label = jax.random.randint(k_lbl, (B,), 0, 2, dtype=jnp.int32)

    out = prompt_bert_forward(params, input_ids, attention_mask, label,
                              PROMPT_LEN, N_HEADS, acc_result=None)
    jax.block_until_ready(out["loss"])
    jax.block_until_ready(out["score"])
    jax.block_until_ready(out["acc_result"]["right"])
    print("KERNEL_OK")
</pallas_src>

<mosaic_0001>
module attributes {stable_mosaic.version = 11 : i64} {
  func.func @_layernorm_kernel(%arg0: i32, %arg1: memref<16x32xf32, #tpu.memory_space<vmem>>, %arg2: memref<1x32xf32, #tpu.memory_space<vmem>>, %arg3: memref<1x32xf32, #tpu.memory_space<vmem>>, %arg4: memref<16x32xbf16, #tpu.memory_space<vmem>>) attributes {dimension_semantics = [#tpu.dimension_semantics<parallel>], iteration_bounds = array<i64: 1>, scalar_prefetch = 0 : i64, scratch_operands = 0 : i64, tpu.core_type = #tpu.core_type<tc>, window_params = [{transform_indices = @transform_0, window_bounds = array<i64: 16, 32>}, {pipeline_mode = #tpu.pipeline_mode<synchronous>, transform_indices = @transform_1, window_bounds = array<i64: 1, 32>}, {pipeline_mode = #tpu.pipeline_mode<synchronous>, transform_indices = @transform_2, window_bounds = array<i64: 1, 32>}, {transform_indices = @transform_3, window_bounds = array<i64: 16, 32>}]} {
    %c0 = arith.constant 0 : index
    %c0_0 = arith.constant 0 : index
    %0 = vector.load %arg1[%c0, %c0_0] : memref<16x32xf32, #tpu.memory_space<vmem>>, vector<16x32xf32>
    %cst = arith.constant dense<0.000000e+00> : vector<16xf32>
    %1 = vector.multi_reduction <add>, %0, %cst [1] : vector<16x32xf32> to vector<16xf32>
    %2 = vector.shape_cast %1 : vector<16xf32> to vector<16x1xf32>
    %cst_1 = arith.constant 3.200000e+01 : f32
    %3 = vector.broadcast %cst_1 : f32 to vector<16x1xf32>
    %4 = arith.divf %2, %3 : vector<16x1xf32>
    %5 = vector.broadcast %4 : vector<16x1xf32> to vector<16x32xf32>
    %6 = arith.subf %0, %5 : vector<16x32xf32>
    %7 = arith.mulf %6, %6 : vector<16x32xf32>
    %cst_2 = arith.constant dense<0.000000e+00> : vector<16xf32>
    %8 = vector.multi_reduction <add>, %7, %cst_2 [1] : vector<16x32xf32> to vector<16xf32>
    %9 = vector.shape_cast %8 : vector<16xf32> to vector<16x1xf32>
    %cst_3 = arith.constant 3.200000e+01 : f32
    %10 = vector.broadcast %cst_3 : f32 to vector<16x1xf32>
    %11 = arith.divf %9, %10 : vector<16x1xf32>
    %12 = vector.broadcast %4 : vector<16x1xf32> to vector<16x32xf32>
    %13 = arith.subf %0, %12 : vector<16x32xf32>
    %cst_4 = arith.constant 9.99999996E-13 : f32
    %14 = vector.broadcast %cst_4 : f32 to vector<16x1xf32>
    %15 = arith.addf %11, %14 : vector<16x1xf32>
    %16 = math.rsqrt %15 : vector<16x1xf32>
    %17 = vector.broadcast %16 : vector<16x1xf32> to vector<16x32xf32>
    %18 = arith.mulf %13, %17 : vector<16x32xf32>
    %c0_5 = arith.constant 0 : index
    %c0_6 = arith.constant 0 : index
    %19 = vector.load %arg2[%c0_5, %c0_6] : memref<1x32xf32, #tpu.memory_space<vmem>>, vector<1x32xf32>
    %20 = vector.broadcast %19 : vector<1x32xf32> to vector<16x32xf32>
    %21 = arith.mulf %18, %20 : vector<16x32xf32>
    %c0_7 = arith.constant 0 : index
    %c0_8 = arith.constant 0 : index
    %22 = vector.load %arg3[%c0_7, %c0_8] : memref<1x32xf32, #tpu.memory_space<vmem>>, vector<1x32xf32>
    %23 = vector.broadcast %22 : vector<1x32xf32> to vector<16x32xf32>
    %24 = arith.addf %21, %23 : vector<16x32xf32>
    %25 = arith.truncf %24 : vector<16x32xf32> to vector<16x32xbf16>
    %c0_9 = arith.constant 0 : index
    %c0_10 = arith.constant 0 : index
    %26 = vector.load %arg4[%c0_9, %c0_10] : memref<16x32xbf16, #tpu.memory_space<vmem>>, vector<16x32xbf16>
    tpu.vector_store %arg4[%c0_9, %c0_10], %25 {strides = array<i32>} : memref<16x32xbf16, #tpu.memory_space<vmem>>, vector<16x32xbf16>,
    return
  }
  func.func @transform_0(%arg0: i32) -> (i32, i32) {
    %c0_i32 = arith.constant 0 : i32
    %c0_i32_0 = arith.constant 0 : i32
    return %arg0, %c0_i32 : i32, i32
  }
  func.func @transform_1(%arg0: i32) -> (i32, i32) {
    %c0_i32 = arith.constant 0 : i32
    %c0_i32_0 = arith.constant 0 : i32
    %c0_i32_1 = arith.constant 0 : i32
    return %c0_i32, %c0_i32_0 : i32, i32
  }
  func.func @transform_2(%arg0: i32) -> (i32, i32) {
    %c0_i32 = arith.constant 0 : i32
    %c0_i32_0 = arith.constant 0 : i32
    %c0_i32_1 = arith.constant 0 : i32
    return %c0_i32, %c0_i32_0 : i32, i32
  }
  func.func @transform_3(%arg0: i32) -> (i32, i32) {
    %c0_i32 = arith.constant 0 : i32
    %c0_i32_0 = arith.constant 0 : i32
    return %arg0, %c0_i32 : i32, i32
  }
}

module attributes {stable_mosaic.version = 11 : i64} {
  func.func @_linear_kernel(%arg0: i32, %arg1: i32, %arg2: i32, %arg3: memref<16x128xbf16, #tpu.memory_space<vmem>>, %arg4: memref<128x128xbf16, #tpu.memory_space<vmem>>, %arg5: memref<1x128xf32, #tpu.memory_space<vmem>>, %arg6: memref<16x128xbf16, #tpu.memory_space<vmem>>, %arg7: memref<16x128xf32, #tpu.memory_space<vmem>>) attributes {dimension_semantics = [#tpu.dimension_semantics<parallel>, #tpu.dimension_semantics<parallel>, #tpu.dimension_semantics<arbitrary>], iteration_bounds = array<i64: 1, 1, 1>, scalar_prefetch = 0 : i64, scratch_operands = 1 : i64, tpu.core_type = #tpu.core_type<tc>, window_params = [{transform_indices = @transform_0, window_bounds = array<i64: 16, 128>}, {transform_indices = @transform_1, window_bounds = array<i64: 128, 128>}, {transform_indices = @transform_2, window_bounds = array<i64: 1, 128>}, {transform_indices = @transform_3, window_bounds = array<i64: 16, 128>}]} {
    %c0_i32 = arith.constant 0 : i32
    %0 = arith.cmpi eq, %arg2, %c0_i32 : i32
    %1 = arith.extui %0 : i1 to i32
    %c0_i32_0 = arith.constant 0 : i32
    %2 = arith.cmpi ne, %1, %c0_i32_0 : i32
    scf.if %2 {
      %cst_10 = arith.constant 0.000000e+00 : f32
      %12 = vector.broadcast %cst_10 : f32 to vector<16x128xf32>
      %c0_11 = arith.constant 0 : index
      %c0_12 = arith.constant 0 : index
      %13 = vector.load %arg7[%c0_11, %c0_12] : memref<16x128xf32, #tpu.memory_space<vmem>>, vector<16x128xf32>
      tpu.vector_store %arg7[%c0_11, %c0_12], %12 {strides = array<i32>} : memref<16x128xf32, #tpu.memory_space<vmem>>, vector<16x128xf32>,
    } else {
    }
    %c0 = arith.constant 0 : index
    %c0_1 = arith.constant 0 : index
    %3 = vector.load %arg7[%c0, %c0_1] : memref<16x128xf32, #tpu.memory_space<vmem>>, vector<16x128xf32>
    %c0_2 = arith.constant 0 : index
    %c0_3 = arith.constant 0 : index
    %4 = vector.load %arg3[%c0_2, %c0_3] : memref<16x128xbf16, #tpu.memory_space<vmem>>, vector<16x128xbf16>
    %c0_4 = arith.constant 0 : index
    %c0_5 = arith.constant 0 : index
    %5 = vector.load %arg4[%c0_4, %c0_5] : memref<128x128xbf16, #tpu.memory_space<vmem>>, vector<128x128xbf16>
    %cst = arith.constant dense<0.000000e+00> : vector<16x128xf32>
    %6 = tpu.matmul %4, %5, %cst {dimension_numbers = #tpu.dot_dimension_numbers<[1], [0], [0], [1], [0, 0, 1, 1], [], []>} : vector<16x128xbf16>, vector<128x128xbf16>, vector<16x128xf32> -> vector<16x128xf32>
    %7 = arith.addf %3, %6 : vector<16x128xf32>
    %c0_6 = arith.constant 0 : index
    %c0_7 = arith.constant 0 : index
    %8 = vector.load %arg7[%c0_6, %c0_7] : memref<16x128xf32, #tpu.memory_space<vmem>>, vector<16x128xf32>
    tpu.vector_store %arg7[%c0_6, %c0_7], %7 {strides = array<i32>} : memref<16x128xf32, #tpu.memory_space<vmem>>, vector<16x128xf32>,
    %c0_i32_8 = arith.constant 0 : i32
    %9 = arith.cmpi eq, %arg2, %c0_i32_8 : i32
    %10 = arith.extui %9 : i1 to i32
    %c0_i32_9 = arith.constant 0 : i32
    %11 = arith.cmpi ne, %10, %c0_i32_9 : i32
    scf.if %11 {
      %c0_10 = arith.constant 0 : index
      %c0_11 = arith.constant 0 : index
      %12 = vector.load %arg7[%c0_10, %c0_11] : memref<16x128xf32, #tpu.memory_space<vmem>>, vector<16x128xf32>
      %c0_12 = arith.constant 0 : index
      %c0_13 = arith.constant 0 : index
      %13 = vector.load %arg5[%c0_12, %c0_13] : memref<1x128xf32, #tpu.memory_space<vmem>>, vector<1x128xf32>
      %14 = vector.broadcast %13 : vector<1x128xf32> to vector<16x128xf32>
      %15 = arith.addf %12, %14 : vector<16x128xf32>
      %16 = arith.truncf %15 : vector<16x128xf32> to vector<16x128xbf16>
      %c0_14 = arith.constant 0 : index
      %c0_15 = arith.constant 0 : index
      %17 = vector.load %arg6[%c0_14, %c0_15] : memref<16x128xbf16, #tpu.memory_space<vmem>>, vector<16x128xbf16>
      tpu.vector_store %arg6[%c0_14, %c0_15], %16 {strides = array<i32>} : memref<16x128xbf16, #tpu.memory_space<vmem>>, vector<16x128xbf16>,
    } else {
    }
    return
  }
  func.func @transform_0(%arg0: i32, %arg1: i32, %arg2: i32) -> (i32, i32) {
    %c0_i32 = arith.constant 0 : i32
    return %arg0, %arg2 : i32, i32
  }
  func.func @transform_1(%arg0: i32, %arg1: i32, %arg2: i32) -> (i32, i32) {
    %c0_i32 = arith.constant 0 : i32
    return %arg2, %arg1 : i32, i32
  }
  func.func @transform_2(%arg0: i32, %arg1: i32, %arg2: i32) -> (i32, i32) {
    %c0_i32 = arith.constant 0 : i32
    %c0_i32_0 = arith.constant 0 : i32
    return %c0_i32, %arg1 : i32, i32
  }
  func.func @transform_3(%arg0: i32, %arg1: i32, %arg2: i32) -> (i32, i32) {
    %c0_i32 = arith.constant 0 : i32
    return %arg0, %arg1 : i32, i32
  }
}

module attributes {stable_mosaic.version = 11 : i64} {
  func.func @_layernorm_kernel(%arg0: i32, %arg1: memref<16x32xbf16, #tpu.memory_space<vmem>>, %arg2: memref<16x32xbf16, #tpu.memory_space<vmem>>, %arg3: memref<1x32xf32, #tpu.memory_space<vmem>>, %arg4: memref<1x32xf32, #tpu.memory_space<vmem>>, %arg5: memref<16x32xbf16, #tpu.memory_space<vmem>>) attributes {dimension_semantics = [#tpu.dimension_semantics<parallel>], iteration_bounds = array<i64: 1>, scalar_prefetch = 0 : i64, scratch_operands = 0 : i64, tpu.core_type = #tpu.core_type<tc>, window_params = [{transform_indices = @transform_0, window_bounds = array<i64: 16, 32>}, {transform_indices = @transform_1, window_bounds = array<i64: 16, 32>}, {pipeline_mode = #tpu.pipeline_mode<synchronous>, transform_indices = @transform_2, window_bounds = array<i64: 1, 32>}, {pipeline_mode = #tpu.pipeline_mode<synchronous>, transform_indices = @transform_3, window_bounds = array<i64: 1, 32>}, {transform_indices = @transform_4, window_bounds = array<i64: 16, 32>}]} {
    %c0 = arith.constant 0 : index
    %c0_0 = arith.constant 0 : index
    %0 = vector.load %arg1[%c0, %c0_0] : memref<16x32xbf16, #tpu.memory_space<vmem>>, vector<16x32xbf16>
    %1 = arith.extf %0 : vector<16x32xbf16> to vector<16x32xf32>
    %c0_1 = arith.constant 0 : index
    %c0_2 = arith.constant 0 : index
    %2 = vector.load %arg2[%c0_1, %c0_2] : memref<16x32xbf16, #tpu.memory_space<vmem>>, vector<16x32xbf16>
    %3 = arith.extf %2 : vector<16x32xbf16> to vector<16x32xf32>
    %4 = arith.addf %1, %3 : vector<16x32xf32>
    %cst = arith.constant dense<0.000000e+00> : vector<16xf32>
    %5 = vector.multi_reduction <add>, %4, %cst [1] : vector<16x32xf32> to vector<16xf32>
    %6 = vector.shape_cast %5 : vector<16xf32> to vector<16x1xf32>
    %cst_3 = arith.constant 3.200000e+01 : f32
    %7 = vector.broadcast %cst_3 : f32 to vector<16x1xf32>
    %8 = arith.divf %6, %7 : vector<16x1xf32>
    %9 = vector.broadcast %8 : vector<16x1xf32> to vector<16x32xf32>
    %10 = arith.subf %4, %9 : vector<16x32xf32>
    %11 = arith.mulf %10, %10 : vector<16x32xf32>
    %cst_4 = arith.constant dense<0.000000e+00> : vector<16xf32>
    %12 = vector.multi_reduction <add>, %11, %cst_4 [1] : vector<16x32xf32> to vector<16xf32>
    %13 = vector.shape_cast %12 : vector<16xf32> to vector<16x1xf32>
    %cst_5 = arith.constant 3.200000e+01 : f32
    %14 = vector.broadcast %cst_5 : f32 to vector<16x1xf32>
    %15 = arith.divf %13, %14 : vector<16x1xf32>
    %16 = vector.broadcast %8 : vector<16x1xf32> to vector<16x32xf32>
    %17 = arith.subf %4, %16 : vector<16x32xf32>
    %cst_6 = arith.constant 9.99999996E-13 : f32
    %18 = vector.broadcast %cst_6 : f32 to vector<16x1xf32>
    %19 = arith.addf %15, %18 : vector<16x1xf32>
    %20 = math.rsqrt %19 : vector<16x1xf32>
    %21 = vector.broadcast %20 : vector<16x1xf32> to vector<16x32xf32>
    %22 = arith.mulf %17, %21 : vector<16x32xf32>
    %c0_7 = arith.constant 0 : index
    %c0_8 = arith.constant 0 : index
    %23 = vector.load %arg3[%c0_7, %c0_8] : memref<1x32xf32, #tpu.memory_space<vmem>>, vector<1x32xf32>
    %24 = vector.broadcast %23 : vector<1x32xf32> to vector<16x32xf32>
    %25 = arith.mulf %22, %24 : vector<16x32xf32>
    %c0_9 = arith.constant 0 : index
    %c0_10 = arith.constant 0 : index
    %26 = vector.load %arg4[%c0_9, %c0_10] : memref<1x32xf32, #tpu.memory_space<vmem>>, vector<1x32xf32>
    %27 = vector.broadcast %26 : vector<1x32xf32> to vector<16x32xf32>
    %28 = arith.addf %25, %27 : vector<16x32xf32>
    %29 = arith.truncf %28 : vector<16x32xf32> to vector<16x32xbf16>
    %c0_11 = arith.constant 0 : index
    %c0_12 = arith.constant 0 : index
    %30 = vector.load %arg5[%c0_11, %c0_12] : memref<16x32xbf16, #tpu.memory_space<vmem>>, vector<16x32xbf16>
    tpu.vector_store %arg5[%c0_11, %c0_12], %29 {strides = array<i32>} : memref<16x32xbf16, #tpu.memory_space<vmem>>, vector<16x32xbf16>,
    return
  }
  func.func @transform_0(%arg0: i32) -> (i32, i32) {
    %c0_i32 = arith.constant 0 : i32
    %c0_i32_0 = arith.constant 0 : i32
    return %arg0, %c0_i32 : i32, i32
  }
  func.func @transform_1(%arg0: i32) -> (i32, i32) {
    %c0_i32 = arith.constant 0 : i32
    %c0_i32_0 = arith.constant 0 : i32
    return %arg0, %c0_i32 : i32, i32
  }
  func.func @transform_2(%arg0: i32) -> (i32, i32) {
    %c0_i32 = arith.constant 0 : i32
    %c0_i32_0 = arith.constant 0 : i32
    %c0_i32_1 = arith.constant 0 : i32
    return %c0_i32, %c0_i32_0 : i32, i32
  }
  func.func @transform_3(%arg0: i32) -> (i32, i32) {
    %c0_i32 = arith.constant 0 : i32
    %c0_i32_0 = arith.constant 0 : i32
    %c0_i32_1 = arith.constant 0 : i32
    return %c0_i32, %c0_i32_0 : i32, i32
  }
  func.func @transform_4(%arg0: i32) -> (i32, i32) {
    %c0_i32 = arith.constant 0 : i32
    %c0_i32_0 = arith.constant 0 : i32
    return %arg0, %c0_i32 : i32, i32
  }
}

module attributes {stable_mosaic.version = 11 : i64} {
  func.func @_attention_kernel(%arg0: i32, %arg1: memref<1x8x96xbf16, #tpu.memory_space<vmem>>, %arg2: memref<1x1x8xf32, #tpu.memory_space<vmem>>, %arg3: memref<1x8x32xbf16, #tpu.memory_space<vmem>>) attributes {dimension_semantics = [#tpu.dimension_semantics<parallel>], iteration_bounds = array<i64: 2>, scalar_prefetch = 0 : i64, scratch_operands = 0 : i64, tpu.core_type = #tpu.core_type<tc>, window_params = [{transform_indices = @transform_0, window_bounds = array<i64: 1, 8, 96>}, {transform_indices = @transform_1, window_bounds = array<i64: 1, 1, 8>}, {transform_indices = @transform_2, window_bounds = array<i64: 1, 8, 32>}]} {
    %c0 = arith.constant 0 : index
    %c0_0 = arith.constant 0 : index
    %c0_1 = arith.constant 0 : index
    %0 = vector.load %arg1[%c0, %c0_0, %c0_1] : memref<1x8x96xbf16, #tpu.memory_space<vmem>>, vector<1x8x96xbf16>
    %1 = vector.shape_cast %0 : vector<1x8x96xbf16> to vector<8x96xbf16>
    %c0_2 = arith.constant 0 : index
    %c0_3 = arith.constant 0 : index
    %c0_4 = arith.constant 0 : index
    %2 = vector.load %arg2[%c0_2, %c0_3, %c0_4] : memref<1x1x8xf32, #tpu.memory_space<vmem>>, vector<1x1x8xf32>
    %3 = vector.shape_cast %2 : vector<1x1x8xf32> to vector<1x8xf32>
    %4 = vector.extract_strided_slice %1 {offsets = [0, 0], sizes = [8, 16], strides = [1, 1]} : vector<8x96xbf16> to vector<8x16xbf16>
    %5 = vector.extract_strided_slice %1 {offsets = [0, 32], sizes = [8, 16], strides = [1, 1]} : vector<8x96xbf16> to vector<8x16xbf16>
    %6 = vector.extract_strided_slice %1 {offsets = [0, 64], sizes = [8, 16], strides = [1, 1]} : vector<8x96xbf16> to vector<8x16xbf16>
    %cst = arith.constant dense<0.000000e+00> : vector<8x8xf32>
    %7 = tpu.matmul %4, %5, %cst {dimension_numbers = #tpu.dot_dimension_numbers<[1], [1], [0], [0], [0, 0, 1, 0], [], []>} : vector<8x16xbf16>, vector<8x16xbf16>, vector<8x8xf32> -> vector<8x8xf32>
    %8 = vector.broadcast %3 : vector<1x8xf32> to vector<8x8xf32>
    %9 = arith.addf %7, %8 : vector<8x8xf32>
    %cst_5 = arith.constant dense<0xFF800000> : vector<8xf32>
    %10 = vector.multi_reduction <maximumf>, %9, %cst_5 [1] : vector<8x8xf32> to vector<8xf32>
    %11 = vector.shape_cast %10 : vector<8xf32> to vector<8x1xf32>
    %12 = vector.broadcast %11 : vector<8x1xf32> to vector<8x8xf32>
    %13 = arith.subf %9, %12 : vector<8x8xf32>
    %14 = math.exp %13 : vector<8x8xf32>
    %cst_6 = arith.constant dense<0.000000e+00> : vector<8xf32>
    %15 = vector.multi_reduction <add>, %14, %cst_6 [1] : vector<8x8xf32> to vector<8xf32>
    %16 = vector.shape_cast %15 : vector<8xf32> to vector<8x1xf32>
    %17 = tpu.reciprocal %16 {approx = true} : vector<8x1xf32> -> vector<8x1xf32>
    %18 = vector.broadcast %17 : vector<8x1xf32> to vector<8x8xf32>
    %19 = arith.mulf %14, %18 : vector<8x8xf32>
    %20 = arith.truncf %19 : vector<8x8xf32> to vector<8x8xbf16>
    %cst_7 = arith.constant dense<0.000000e+00> : vector<8x16xf32>
    %21 = tpu.matmul %20, %6, %cst_7 {dimension_numbers = #tpu.dot_dimension_numbers<[1], [0], [0], [1], [0, 0, 1, 1], [], []>} : vector<8x8xbf16>, vector<8x16xbf16>, vector<8x16xf32> -> vector<8x16xf32>
    %22 = vector.extract_strided_slice %1 {offsets = [0, 16], sizes = [8, 16], strides = [1, 1]} : vector<8x96xbf16> to vector<8x16xbf16>
    %23 = vector.extract_strided_slice %1 {offsets = [0, 48], sizes = [8, 16], strides = [1, 1]} : vector<8x96xbf16> to vector<8x16xbf16>
    %24 = vector.extract_strided_slice %1 {offsets = [0, 80], sizes = [8, 16], strides = [1, 1]} : vector<8x96xbf16> to vector<8x16xbf16>
    %cst_8 = arith.constant dense<0.000000e+00> : vector<8x8xf32>
    %25 = tpu.matmul %22, %23, %cst_8 {dimension_numbers = #tpu.dot_dimension_numbers<[1], [1], [0], [0], [0, 0, 1, 0], [], []>} : vector<8x16xbf16>, vector<8x16xbf16>, vector<8x8xf32> -> vector<8x8xf32>
    %26 = vector.broadcast %3 : vector<1x8xf32> to vector<8x8xf32>
    %27 = arith.addf %25, %26 : vector<8x8xf32>
    %cst_9 = arith.constant dense<0xFF800000> : vector<8xf32>
    %28 = vector.multi_reduction <maximumf>, %27, %cst_9 [1] : vector<8x8xf32> to vector<8xf32>
    %29 = vector.shape_cast %28 : vector<8xf32> to vector<8x1xf32>
    %30 = vector.broadcast %29 : vector<8x1xf32> to vector<8x8xf32>
    %31 = arith.subf %27, %30 : vector<8x8xf32>
    %32 = math.exp %31 : vector<8x8xf32>
    %cst_10 = arith.constant dense<0.000000e+00> : vector<8xf32>
    %33 = vector.multi_reduction <add>, %32, %cst_10 [1] : vector<8x8xf32> to vector<8xf32>
    %34 = vector.shape_cast %33 : vector<8xf32> to vector<8x1xf32>
    %35 = tpu.reciprocal %34 {approx = true} : vector<8x1xf32> -> vector<8x1xf32>
    %36 = vector.broadcast %35 : vector<8x1xf32> to vector<8x8xf32>
    %37 = arith.mulf %32, %36 : vector<8x8xf32>
    %38 = arith.truncf %37 : vector<8x8xf32> to vector<8x8xbf16>
    %cst_11 = arith.constant dense<0.000000e+00> : vector<8x16xf32>
    %39 = tpu.matmul %38, %24, %cst_11 {dimension_numbers = #tpu.dot_dimension_numbers<[1], [0], [0], [1], [0, 0, 1, 1], [], []>} : vector<8x8xbf16>, vector<8x16xbf16>, vector<8x16xf32> -> vector<8x16xf32>
    %40 = tpu.concatenate %21, %39 in 1 : vector<8x16xf32>, vector<8x16xf32> -> vector<8x32xf32>
    %41 = arith.truncf %40 : vector<8x32xf32> to vector<8x32xbf16>
    %c0_12 = arith.constant 0 : index
    %c0_13 = arith.constant 0 : index
    %c0_14 = arith.constant 0 : index
    %42 = vector.load %arg3[%c0_12, %c0_13, %c0_14] : memref<1x8x32xbf16, #tpu.memory_space<vmem>>, vector<1x8x32xbf16>
    %43 = vector.shape_cast %42 : vector<1x8x32xbf16> to vector<8x32xbf16>
    %44 = vector.shape_cast %41 : vector<8x32xbf16> to vector<1x8x32xbf16>
    tpu.vector_store %arg3[%c0_12, %c0_13, %c0_14], %44 {strides = array<i32>} : memref<1x8x32xbf16, #tpu.memory_space<vmem>>, vector<1x8x32xbf16>,
    return
  }
  func.func @transform_0(%arg0: i32) -> (i32, i32, i32) {
    %c0_i32 = arith.constant 0 : i32
    %c0_i32_0 = arith.constant 0 : i32
    %c0_i32_1 = arith.constant 0 : i32
    return %arg0, %c0_i32, %c0_i32_0 : i32, i32, i32
  }
  func.func @transform_1(%arg0: i32) -> (i32, i32, i32) {
    %c0_i32 = arith.constant 0 : i32
    %c0_i32_0 = arith.constant 0 : i32
    %c0_i32_1 = arith.constant 0 : i32
    return %arg0, %c0_i32, %c0_i32_0 : i32, i32, i32
  }
  func.func @transform_2(%arg0: i32) -> (i32, i32, i32) {
    %c0_i32 = arith.constant 0 : i32
    %c0_i32_0 = arith.constant 0 : i32
    %c0_i32_1 = arith.constant 0 : i32
    return %arg0, %c0_i32, %c0_i32_0 : i32, i32, i32
  }
}

module attributes {stable_mosaic.version = 11 : i64} {
  func.func @_linear_kernel(%arg0: i32, %arg1: i32, %arg2: i32, %arg3: memref<16x128xbf16, #tpu.memory_space<vmem>>, %arg4: memref<128x128xbf16, #tpu.memory_space<vmem>>, %arg5: memref<1x128xf32, #tpu.memory_space<vmem>>, %arg6: memref<16x128xbf16, #tpu.memory_space<vmem>>, %arg7: memref<16x128xf32, #tpu.memory_space<vmem>>) attributes {dimension_semantics = [#tpu.dimension_semantics<parallel>, #tpu.dimension_semantics<parallel>, #tpu.dimension_semantics<arbitrary>], iteration_bounds = array<i64: 1, 1, 1>, scalar_prefetch = 0 : i64, scratch_operands = 1 : i64, tpu.core_type = #tpu.core_type<tc>, window_params = [{transform_indices = @transform_0, window_bounds = array<i64: 16, 128>}, {transform_indices = @transform_1, window_bounds = array<i64: 128, 128>}, {transform_indices = @transform_2, window_bounds = array<i64: 1, 128>}, {transform_indices = @transform_3, window_bounds = array<i64: 16, 128>}]} {
    %c0_i32 = arith.constant 0 : i32
    %0 = arith.cmpi eq, %arg2, %c0_i32 : i32
    %1 = arith.extui %0 : i1 to i32
    %c0_i32_0 = arith.constant 0 : i32
    %2 = arith.cmpi ne, %1, %c0_i32_0 : i32
    scf.if %2 {
      %cst_10 = arith.constant 0.000000e+00 : f32
      %12 = vector.broadcast %cst_10 : f32 to vector<16x128xf32>
      %c0_11 = arith.constant 0 : index
      %c0_12 = arith.constant 0 : index
      %13 = vector.load %arg7[%c0_11, %c0_12] : memref<16x128xf32, #tpu.memory_space<vmem>>, vector<16x128xf32>
      tpu.vector_store %arg7[%c0_11, %c0_12], %12 {strides = array<i32>} : memref<16x128xf32, #tpu.memory_space<vmem>>, vector<16x128xf32>,
    } else {
    }
    %c0 = arith.constant 0 : index
    %c0_1 = arith.constant 0 : index
    %3 = vector.load %arg7[%c0, %c0_1] : memref<16x128xf32, #tpu.memory_space<vmem>>, vector<16x128xf32>
    %c0_2 = arith.constant 0 : index
    %c0_3 = arith.constant 0 : index
    %4 = vector.load %arg3[%c0_2, %c0_3] : memref<16x128xbf16, #tpu.memory_space<vmem>>, vector<16x128xbf16>
    %c0_4 = arith.constant 0 : index
    %c0_5 = arith.constant 0 : index
    %5 = vector.load %arg4[%c0_4, %c0_5] : memref<128x128xbf16, #tpu.memory_space<vmem>>, vector<128x128xbf16>
    %cst = arith.constant dense<0.000000e+00> : vector<16x128xf32>
    %6 = tpu.matmul %4, %5, %cst {dimension_numbers = #tpu.dot_dimension_numbers<[1], [0], [0], [1], [0, 0, 1, 1], [], []>} : vector<16x128xbf16>, vector<128x128xbf16>, vector<16x128xf32> -> vector<16x128xf32>
    %7 = arith.addf %3, %6 : vector<16x128xf32>
    %c0_6 = arith.constant 0 : index
    %c0_7 = arith.constant 0 : index
    %8 = vector.load %arg7[%c0_6, %c0_7] : memref<16x128xf32, #tpu.memory_space<vmem>>, vector<16x128xf32>
    tpu.vector_store %arg7[%c0_6, %c0_7], %7 {strides = array<i32>} : memref<16x128xf32, #tpu.memory_space<vmem>>, vector<16x128xf32>,
    %c0_i32_8 = arith.constant 0 : i32
    %9 = arith.cmpi eq, %arg2, %c0_i32_8 : i32
    %10 = arith.extui %9 : i1 to i32
    %c0_i32_9 = arith.constant 0 : i32
    %11 = arith.cmpi ne, %10, %c0_i32_9 : i32
    scf.if %11 {
      %c0_10 = arith.constant 0 : index
      %c0_11 = arith.constant 0 : index
      %12 = vector.load %arg7[%c0_10, %c0_11] : memref<16x128xf32, #tpu.memory_space<vmem>>, vector<16x128xf32>
      %c0_12 = arith.constant 0 : index
      %c0_13 = arith.constant 0 : index
      %13 = vector.load %arg5[%c0_12, %c0_13] : memref<1x128xf32, #tpu.memory_space<vmem>>, vector<1x128xf32>
      %14 = vector.broadcast %13 : vector<1x128xf32> to vector<16x128xf32>
      %15 = arith.addf %12, %14 : vector<16x128xf32>
      %16 = arith.mulf %15, %15 : vector<16x128xf32>
      %17 = arith.mulf %15, %16 : vector<16x128xf32>
      %cst_14 = arith.constant 4.471500e-02 : f32
      %18 = vector.broadcast %cst_14 : f32 to vector<16x128xf32>
      %19 = arith.mulf %18, %17 : vector<16x128xf32>
      %20 = arith.addf %15, %19 : vector<16x128xf32>
      %cst_15 = arith.constant 0.797884583 : f32
      %21 = vector.broadcast %cst_15 : f32 to vector<16x128xf32>
      %22 = arith.mulf %21, %20 : vector<16x128xf32>
      %23 = math.tanh %22 : vector<16x128xf32>
      %cst_16 = arith.constant 1.000000e+00 : f32
      %24 = vector.broadcast %cst_16 : f32 to vector<16x128xf32>
      %25 = arith.addf %24, %23 : vector<16x128xf32>
      %cst_17 = arith.constant 5.000000e-01 : f32
      %26 = vector.broadcast %cst_17 : f32 to vector<16x128xf32>
      %27 = arith.mulf %26, %25 : vector<16x128xf32>
      %28 = arith.mulf %15, %27 : vector<16x128xf32>
      %29 = arith.truncf %28 : vector<16x128xf32> to vector<16x128xbf16>
      %c0_18 = arith.constant 0 : index
      %c0_19 = arith.constant 0 : index
      %30 = vector.load %arg6[%c0_18, %c0_19] : memref<16x128xbf16, #tpu.memory_space<vmem>>, vector<16x128xbf16>
      tpu.vector_store %arg6[%c0_18, %c0_19], %29 {strides = array<i32>} : memref<16x128xbf16, #tpu.memory_space<vmem>>, vector<16x128xbf16>,
    } else {
    }
    return
  }
  func.func @transform_0(%arg0: i32, %arg1: i32, %arg2: i32) -> (i32, i32) {
    %c0_i32 = arith.constant 0 : i32
    return %arg0, %arg2 : i32, i32
  }
  func.func @transform_1(%arg0: i32, %arg1: i32, %arg2: i32) -> (i32, i32) {
    %c0_i32 = arith.constant 0 : i32
    return %arg2, %arg1 : i32, i32
  }
  func.func @transform_2(%arg0: i32, %arg1: i32, %arg2: i32) -> (i32, i32) {
    %c0_i32 = arith.constant 0 : i32
    %c0_i32_0 = arith.constant 0 : i32
    return %c0_i32, %arg1 : i32, i32
  }
  func.func @transform_3(%arg0: i32, %arg1: i32, %arg2: i32) -> (i32, i32) {
    %c0_i32 = arith.constant 0 : i32
    return %arg0, %arg1 : i32, i32
  }
}

module attributes {stable_mosaic.version = 11 : i64} {
  func.func @_linear_kernel(%arg0: i32, %arg1: i32, %arg2: i32, %arg3: memref<8x128xbf16, #tpu.memory_space<vmem>>, %arg4: memref<128x128xbf16, #tpu.memory_space<vmem>>, %arg5: memref<1x128xf32, #tpu.memory_space<vmem>>, %arg6: memref<8x128xbf16, #tpu.memory_space<vmem>>, %arg7: memref<8x128xf32, #tpu.memory_space<vmem>>) attributes {dimension_semantics = [#tpu.dimension_semantics<parallel>, #tpu.dimension_semantics<parallel>, #tpu.dimension_semantics<arbitrary>], iteration_bounds = array<i64: 1, 1, 1>, scalar_prefetch = 0 : i64, scratch_operands = 1 : i64, tpu.core_type = #tpu.core_type<tc>, window_params = [{transform_indices = @transform_0, window_bounds = array<i64: 8, 128>}, {transform_indices = @transform_1, window_bounds = array<i64: 128, 128>}, {transform_indices = @transform_2, window_bounds = array<i64: 1, 128>}, {transform_indices = @transform_3, window_bounds = array<i64: 8, 128>}]} {
    %c0_i32 = arith.constant 0 : i32
    %0 = arith.cmpi eq, %arg2, %c0_i32 : i32
    %1 = arith.extui %0 : i1 to i32
    %c0_i32_0 = arith.constant 0 : i32
    %2 = arith.cmpi ne, %1, %c0_i32_0 : i32
    scf.if %2 {
      %cst_10 = arith.constant 0.000000e+00 : f32
      %12 = vector.broadcast %cst_10 : f32 to vector<8x128xf32>
      %c0_11 = arith.constant 0 : index
      %c0_12 = arith.constant 0 : index
      %13 = vector.load %arg7[%c0_11, %c0_12] : memref<8x128xf32, #tpu.memory_space<vmem>>, vector<8x128xf32>
      tpu.vector_store %arg7[%c0_11, %c0_12], %12 {strides = array<i32>} : memref<8x128xf32, #tpu.memory_space<vmem>>, vector<8x128xf32>,
    } else {
    }
    %c0 = arith.constant 0 : index
    %c0_1 = arith.constant 0 : index
    %3 = vector.load %arg7[%c0, %c0_1] : memref<8x128xf32, #tpu.memory_space<vmem>>, vector<8x128xf32>
    %c0_2 = arith.constant 0 : index
    %c0_3 = arith.constant 0 : index
    %4 = vector.load %arg3[%c0_2, %c0_3] : memref<8x128xbf16, #tpu.memory_space<vmem>>, vector<8x128xbf16>
    %c0_4 = arith.constant 0 : index
    %c0_5 = arith.constant 0 : index
    %5 = vector.load %arg4[%c0_4, %c0_5] : memref<128x128xbf16, #tpu.memory_space<vmem>>, vector<128x128xbf16>
    %cst = arith.constant dense<0.000000e+00> : vector<8x128xf32>
    %6 = tpu.matmul %4, %5, %cst {dimension_numbers = #tpu.dot_dimension_numbers<[1], [0], [0], [1], [0, 0, 1, 1], [], []>} : vector<8x128xbf16>, vector<128x128xbf16>, vector<8x128xf32> -> vector<8x128xf32>
    %7 = arith.addf %3, %6 : vector<8x128xf32>
    %c0_6 = arith.constant 0 : index
    %c0_7 = arith.constant 0 : index
    %8 = vector.load %arg7[%c0_6, %c0_7] : memref<8x128xf32, #tpu.memory_space<vmem>>, vector<8x128xf32>
    tpu.vector_store %arg7[%c0_6, %c0_7], %7 {strides = array<i32>} : memref<8x128xf32, #tpu.memory_space<vmem>>, vector<8x128xf32>,
    %c0_i32_8 = arith.constant 0 : i32
    %9 = arith.cmpi eq, %arg2, %c0_i32_8 : i32
    %10 = arith.extui %9 : i1 to i32
    %c0_i32_9 = arith.constant 0 : i32
    %11 = arith.cmpi ne, %10, %c0_i32_9 : i32
    scf.if %11 {
      %c0_10 = arith.constant 0 : index
      %c0_11 = arith.constant 0 : index
      %12 = vector.load %arg7[%c0_10, %c0_11] : memref<8x128xf32, #tpu.memory_space<vmem>>, vector<8x128xf32>
      %c0_12 = arith.constant 0 : index
      %c0_13 = arith.constant 0 : index
      %13 = vector.load %arg5[%c0_12, %c0_13] : memref<1x128xf32, #tpu.memory_space<vmem>>, vector<1x128xf32>
      %14 = vector.broadcast %13 : vector<1x128xf32> to vector<8x128xf32>
      %15 = arith.addf %12, %14 : vector<8x128xf32>
      %16 = arith.mulf %15, %15 : vector<8x128xf32>
      %17 = arith.mulf %15, %16 : vector<8x128xf32>
      %cst_14 = arith.constant 4.471500e-02 : f32
      %18 = vector.broadcast %cst_14 : f32 to vector<8x128xf32>
      %19 = arith.mulf %18, %17 : vector<8x128xf32>
      %20 = arith.addf %15, %19 : vector<8x128xf32>
      %cst_15 = arith.constant 0.797884583 : f32
      %21 = vector.broadcast %cst_15 : f32 to vector<8x128xf32>
      %22 = arith.mulf %21, %20 : vector<8x128xf32>
      %23 = math.tanh %22 : vector<8x128xf32>
      %cst_16 = arith.constant 1.000000e+00 : f32
      %24 = vector.broadcast %cst_16 : f32 to vector<8x128xf32>
      %25 = arith.addf %24, %23 : vector<8x128xf32>
      %cst_17 = arith.constant 5.000000e-01 : f32
      %26 = vector.broadcast %cst_17 : f32 to vector<8x128xf32>
      %27 = arith.mulf %26, %25 : vector<8x128xf32>
      %28 = arith.mulf %15, %27 : vector<8x128xf32>
      %29 = arith.truncf %28 : vector<8x128xf32> to vector<8x128xbf16>
      %c0_18 = arith.constant 0 : index
      %c0_19 = arith.constant 0 : index
      %30 = vector.load %arg6[%c0_18, %c0_19] : memref<8x128xbf16, #tpu.memory_space<vmem>>, vector<8x128xbf16>
      tpu.vector_store %arg6[%c0_18, %c0_19], %29 {strides = array<i32>} : memref<8x128xbf16, #tpu.memory_space<vmem>>, vector<8x128xbf16>,
    } else {
    }
    return
  }
  func.func @transform_0(%arg0: i32, %arg1: i32, %arg2: i32) -> (i32, i32) {
    %c0_i32 = arith.constant 0 : i32
    return %arg0, %arg2 : i32, i32
  }
  func.func @transform_1(%arg0: i32, %arg1: i32, %arg2: i32) -> (i32, i32) {
    %c0_i32 = arith.constant 0 : i32
    return %arg2, %arg1 : i32, i32
  }
  func.func @transform_2(%arg0: i32, %arg1: i32, %arg2: i32) -> (i32, i32) {
    %c0_i32 = arith.constant 0 : i32
    %c0_i32_0 = arith.constant 0 : i32
    return %c0_i32, %arg1 : i32, i32
  }
  func.func @transform_3(%arg0: i32, %arg1: i32, %arg2: i32) -> (i32, i32) {
    %c0_i32 = arith.constant 0 : i32
    return %arg0, %arg1 : i32, i32
  }
}

module attributes {stable_mosaic.version = 11 : i64} {
  func.func @_layernorm_kernel(%arg0: i32, %arg1: memref<8x32xbf16, #tpu.memory_space<vmem>>, %arg2: memref<1x32xf32, #tpu.memory_space<vmem>>, %arg3: memref<1x32xf32, #tpu.memory_space<vmem>>, %arg4: memref<8x32xbf16, #tpu.memory_space<vmem>>) attributes {dimension_semantics = [#tpu.dimension_semantics<parallel>], iteration_bounds = array<i64: 1>, scalar_prefetch = 0 : i64, scratch_operands = 0 : i64, tpu.core_type = #tpu.core_type<tc>, window_params = [{transform_indices = @transform_0, window_bounds = array<i64: 8, 32>}, {pipeline_mode = #tpu.pipeline_mode<synchronous>, transform_indices = @transform_1, window_bounds = array<i64: 1, 32>}, {pipeline_mode = #tpu.pipeline_mode<synchronous>, transform_indices = @transform_2, window_bounds = array<i64: 1, 32>}, {transform_indices = @transform_3, window_bounds = array<i64: 8, 32>}]} {
    %c0 = arith.constant 0 : index
    %c0_0 = arith.constant 0 : index
    %0 = vector.load %arg1[%c0, %c0_0] : memref<8x32xbf16, #tpu.memory_space<vmem>>, vector<8x32xbf16>
    %1 = arith.extf %0 : vector<8x32xbf16> to vector<8x32xf32>
    %cst = arith.constant dense<0.000000e+00> : vector<8xf32>
    %2 = vector.multi_reduction <add>, %1, %cst [1] : vector<8x32xf32> to vector<8xf32>
    %3 = vector.shape_cast %2 : vector<8xf32> to vector<8x1xf32>
    %cst_1 = arith.constant 3.200000e+01 : f32
    %4 = vector.broadcast %cst_1 : f32 to vector<8x1xf32>
    %5 = arith.divf %3, %4 : vector<8x1xf32>
    %6 = vector.broadcast %5 : vector<8x1xf32> to vector<8x32xf32>
    %7 = arith.subf %1, %6 : vector<8x32xf32>
    %8 = arith.mulf %7, %7 : vector<8x32xf32>
    %cst_2 = arith.constant dense<0.000000e+00> : vector<8xf32>
    %9 = vector.multi_reduction <add>, %8, %cst_2 [1] : vector<8x32xf32> to vector<8xf32>
    %10 = vector.shape_cast %9 : vector<8xf32> to vector<8x1xf32>
    %cst_3 = arith.constant 3.200000e+01 : f32
    %11 = vector.broadcast %cst_3 : f32 to vector<8x1xf32>
    %12 = arith.divf %10, %11 : vector<8x1xf32>
    %13 = vector.broadcast %5 : vector<8x1xf32> to vector<8x32xf32>
    %14 = arith.subf %1, %13 : vector<8x32xf32>
    %cst_4 = arith.constant 9.99999996E-13 : f32
    %15 = vector.broadcast %cst_4 : f32 to vector<8x1xf32>
    %16 = arith.addf %12, %15 : vector<8x1xf32>
    %17 = math.rsqrt %16 : vector<8x1xf32>
    %18 = vector.broadcast %17 : vector<8x1xf32> to vector<8x32xf32>
    %19 = arith.mulf %14, %18 : vector<8x32xf32>
    %c0_5 = arith.constant 0 : index
    %c0_6 = arith.constant 0 : index
    %20 = vector.load %arg2[%c0_5, %c0_6] : memref<1x32xf32, #tpu.memory_space<vmem>>, vector<1x32xf32>
    %21 = vector.broadcast %20 : vector<1x32xf32> to vector<8x32xf32>
    %22 = arith.mulf %19, %21 : vector<8x32xf32>
    %c0_7 = arith.constant 0 : index
    %c0_8 = arith.constant 0 : index
    %23 = vector.load %arg3[%c0_7, %c0_8] : memref<1x32xf32, #tpu.memory_space<vmem>>, vector<1x32xf32>
    %24 = vector.broadcast %23 : vector<1x32xf32> to vector<8x32xf32>
    %25 = arith.addf %22, %24 : vector<8x32xf32>
    %26 = arith.truncf %25 : vector<8x32xf32> to vector<8x32xbf16>
    %c0_9 = arith.constant 0 : index
    %c0_10 = arith.constant 0 : index
    %27 = vector.load %arg4[%c0_9, %c0_10] : memref<8x32xbf16, #tpu.memory_space<vmem>>, vector<8x32xbf16>
    tpu.vector_store %arg4[%c0_9, %c0_10], %26 {strides = array<i32>} : memref<8x32xbf16, #tpu.memory_space<vmem>>, vector<8x32xbf16>,
    return
  }
  func.func @transform_0(%arg0: i32) -> (i32, i32) {
    %c0_i32 = arith.constant 0 : i32
    %c0_i32_0 = arith.constant 0 : i32
    return %arg0, %c0_i32 : i32, i32
  }
  func.func @transform_1(%arg0: i32) -> (i32, i32) {
    %c0_i32 = arith.constant 0 : i32
    %c0_i32_0 = arith.constant 0 : i32
    %c0_i32_1 = arith.constant 0 : i32
    return %c0_i32, %c0_i32_0 : i32, i32
  }
  func.func @transform_2(%arg0: i32) -> (i32, i32) {
    %c0_i32 = arith.constant 0 : i32
    %c0_i32_0 = arith.constant 0 : i32
    %c0_i32_1 = arith.constant 0 : i32
    return %c0_i32, %c0_i32_0 : i32, i32
  }
  func.func @transform_3(%arg0: i32) -> (i32, i32) {
    %c0_i32 = arith.constant 0 : i32
    %c0_i32_0 = arith.constant 0 : i32
    return %arg0, %c0_i32 : i32, i32
  }
}

module attributes {stable_mosaic.version = 11 : i64} {
  func.func @_linear_kernel(%arg0: i32, %arg1: i32, %arg2: i32, %arg3: memref<8x128xbf16, #tpu.memory_space<vmem>>, %arg4: memref<128x128xbf16, #tpu.memory_space<vmem>>, %arg5: memref<1x128xf32, #tpu.memory_space<vmem>>, %arg6: memref<8x128xf32, #tpu.memory_space<vmem>>, %arg7: memref<8x128xf32, #tpu.memory_space<vmem>>) attributes {dimension_semantics = [#tpu.dimension_semantics<parallel>, #tpu.dimension_semantics<parallel>, #tpu.dimension_semantics<arbitrary>], iteration_bounds = array<i64: 1, 1, 1>, scalar_prefetch = 0 : i64, scratch_operands = 1 : i64, tpu.core_type = #tpu.core_type<tc>, window_params = [{transform_indices = @transform_0, window_bounds = array<i64: 8, 128>}, {transform_indices = @transform_1, window_bounds = array<i64: 128, 128>}, {transform_indices = @transform_2, window_bounds = array<i64: 1, 128>}, {transform_indices = @transform_3, window_bounds = array<i64: 8, 128>}]} {
    %c0_i32 = arith.constant 0 : i32
    %0 = arith.cmpi eq, %arg2, %c0_i32 : i32
    %1 = arith.extui %0 : i1 to i32
    %c0_i32_0 = arith.constant 0 : i32
    %2 = arith.cmpi ne, %1, %c0_i32_0 : i32
    scf.if %2 {
      %cst_10 = arith.constant 0.000000e+00 : f32
      %12 = vector.broadcast %cst_10 : f32 to vector<8x128xf32>
      %c0_11 = arith.constant 0 : index
      %c0_12 = arith.constant 0 : index
      %13 = vector.load %arg7[%c0_11, %c0_12] : memref<8x128xf32, #tpu.memory_space<vmem>>, vector<8x128xf32>
      tpu.vector_store %arg7[%c0_11, %c0_12], %12 {strides = array<i32>} : memref<8x128xf32, #tpu.memory_space<vmem>>, vector<8x128xf32>,
    } else {
    }
    %c0 = arith.constant 0 : index
    %c0_1 = arith.constant 0 : index
    %3 = vector.load %arg7[%c0, %c0_1] : memref<8x128xf32, #tpu.memory_space<vmem>>, vector<8x128xf32>
    %c0_2 = arith.constant 0 : index
    %c0_3 = arith.constant 0 : index
    %4 = vector.load %arg3[%c0_2, %c0_3] : memref<8x128xbf16, #tpu.memory_space<vmem>>, vector<8x128xbf16>
    %c0_4 = arith.constant 0 : index
    %c0_5 = arith.constant 0 : index
    %5 = vector.load %arg4[%c0_4, %c0_5] : memref<128x128xbf16, #tpu.memory_space<vmem>>, vector<128x128xbf16>
    %cst = arith.constant dense<0.000000e+00> : vector<8x128xf32>
    %6 = tpu.matmul %4, %5, %cst {dimension_numbers = #tpu.dot_dimension_numbers<[1], [0], [0], [1], [0, 0, 1, 1], [], []>} : vector<8x128xbf16>, vector<128x128xbf16>, vector<8x128xf32> -> vector<8x128xf32>
    %7 = arith.addf %3, %6 : vector<8x128xf32>
    %c0_6 = arith.constant 0 : index
    %c0_7 = arith.constant 0 : index
    %8 = vector.load %arg7[%c0_6, %c0_7] : memref<8x128xf32, #tpu.memory_space<vmem>>, vector<8x128xf32>
    tpu.vector_store %arg7[%c0_6, %c0_7], %7 {strides = array<i32>} : memref<8x128xf32, #tpu.memory_space<vmem>>, vector<8x128xf32>,
    %c0_i32_8 = arith.constant 0 : i32
    %9 = arith.cmpi eq, %arg2, %c0_i32_8 : i32
    %10 = arith.extui %9 : i1 to i32
    %c0_i32_9 = arith.constant 0 : i32
    %11 = arith.cmpi ne, %10, %c0_i32_9 : i32
    scf.if %11 {
      %c0_10 = arith.constant 0 : index
      %c0_11 = arith.constant 0 : index
      %12 = vector.load %arg7[%c0_10, %c0_11] : memref<8x128xf32, #tpu.memory_space<vmem>>, vector<8x128xf32>
      %c0_12 = arith.constant 0 : index
      %c0_13 = arith.constant 0 : index
      %13 = vector.load %arg5[%c0_12, %c0_13] : memref<1x128xf32, #tpu.memory_space<vmem>>, vector<1x128xf32>
      %14 = vector.broadcast %13 : vector<1x128xf32> to vector<8x128xf32>
      %15 = arith.addf %12, %14 : vector<8x128xf32>
      %c0_14 = arith.constant 0 : index
      %c0_15 = arith.constant 0 : index
      %16 = vector.load %arg6[%c0_14, %c0_15] : memref<8x128xf32, #tpu.memory_space<vmem>>, vector<8x128xf32>
      tpu.vector_store %arg6[%c0_14, %c0_15], %15 {strides = array<i32>} : memref<8x128xf32, #tpu.memory_space<vmem>>, vector<8x128xf32>,
    } else {
    }
    return
  }
  func.func @transform_0(%arg0: i32, %arg1: i32, %arg2: i32) -> (i32, i32) {
    %c0_i32 = arith.constant 0 : i32
    return %arg0, %arg2 : i32, i32
  }
  func.func @transform_1(%arg0: i32, %arg1: i32, %arg2: i32) -> (i32, i32) {
    %c0_i32 = arith.constant 0 : i32
    return %arg2, %arg1 : i32, i32
  }
  func.func @transform_2(%arg0: i32, %arg1: i32, %arg2: i32) -> (i32, i32) {
    %c0_i32 = arith.constant 0 : i32
    %c0_i32_0 = arith.constant 0 : i32
    return %c0_i32, %arg1 : i32, i32
  }
  func.func @transform_3(%arg0: i32, %arg1: i32, %arg2: i32) -> (i32, i32) {
    %c0_i32 = arith.constant 0 : i32
    return %arg0, %arg1 : i32, i32
  }
}

</mosaic_0001>

<llo_original>
// kernel: _prompt_bert_core.18
$region0: #{_prompt_bert_core.18}
  #allocation0 [shape = 'u32[]', space=smem, size = 0x4, offset = 0x4, fixed_abs, tag = 'smem constant byte address 0x4 - core index']
  #allocation1 [shape = 'u32[144,128]{1,0:T(1,128)}', space=vmem, size = 0x12000, scoped, tag = 'internal scratch']
  %s0 = inlined_call_operand.vmem [shape: f32[16,32], index: 0, kind: input, shape index: {}]
  %s1 = inlined_call_operand.vmem [shape: f32[1,32], index: 1, kind: input, shape index: {}]
  %s2 = inlined_call_operand.vmem [shape: f32[1,32], index: 2, kind: input, shape index: {}]
  %s3 = inlined_call_operand.vmem [shape: bf16[16,32], index: 3, kind: output, shape index: {}]
  %s4 = sld [smem:[#allocation0]]
  $region22: #{_prompt_bert_core.18} parent=0
    _
  %s6 = ssub.s32 1, %s4
  %s7 = scalar_select 0, %s6, %s4
  // Predicated region
  $region2: #{_prompt_bert_core.18} parent=0 // pred_check
    _
  $region3: #{_prompt_bert_core.18} parent=0 // pred_check_branch
    %9 = sbr.rel (0) target = $region5
  $region4: #{_prompt_bert_core.18} parent=0 // pred_region
    _
  $region5: #{_prompt_bert_core.18} parent=0 // pred_fallthru
    _
  // Predicated region
  $region6: #{_prompt_bert_core.18} parent=0 // pred_check
    _
  $region7: #{_prompt_bert_core.18} parent=0 // pred_check_branch
    %11 = sbr.rel (0) target = $region9
  $region8: #{_prompt_bert_core.18} parent=0 // pred_region
    _
  $region9: #{_prompt_bert_core.18} parent=0 // pred_fallthru
    _
  // Predicated region
  $region10: #{_prompt_bert_core.18} parent=0 // pred_check
    _
  $region11: #{_prompt_bert_core.18} parent=0 // pred_check_branch
    %13 = sbr.rel (0) target = $region13
  $region12: #{_prompt_bert_core.18} parent=0 // pred_region
    _
  $region13: #{_prompt_bert_core.18} parent=0 // pred_fallthru
    _
  %v14 = vld [vmem:[%s0] sm:$0xff]
  %v15 = vld [vmem:[%s0 + $0x8] sm:$0xff]
  %vm16 = vcmask 261120
  %v17 = vsel %vm16, %v14, 0.0
  %18 = vadd.xlane.f32.xlu0 %v17
  %v19 = vpop.xlane.xlu0 %18
  %v20 = vsel %vm16, %v15, 0.0
  %21 = vadd.xlane.f32.xlu0 %v20
  %v22 = vpop.xlane.xlu0 %21
  %v23 = vrcp.pop 32.0
  %v24 = vmul.f32 %v19, %v23
  %v25 = vmul.f32 %v22, %v23
  %v26 = vsub.f32 %v14, %v24
  %v27 = vsub.f32 %v15, %v25
  %v28 = vmul.f32 %v26, %v26
  %v29 = vmul.f32 %v27, %v27
  %v30 = vsel %vm16, %v28, 0.0
  %31 = vadd.xlane.f32.xlu0 %v30
  %v32 = vpop.xlane.xlu0 %31
  %v33 = vsel %vm16, %v29, 0.0
  %34 = vadd.xlane.f32.xlu0 %v33
  %v35 = vpop.xlane.xlu0 %34
  %v36 = vmul.f32 %v32, %v23
  %v37 = vmul.f32 %v35, %v23
  %v38 = vadd.f32 %v36, 1e-12
  %v39 = vadd.f32 %v37, 1e-12
  %v40 = vrsqrt.pop %v38
  %v41 = vrsqrt.pop %v39
  %v42 = vmul.f32 %v26, %v40
  %v43 = vmul.f32 %v27, %v41
  %v44 = vld [vmem:[%s1] sm:$0x1]
  %v46 = vlaneseq
  %v47 = vshrl.u32 %v46, 7
  %v48 = vsub.s32 0, %v47
  %v49 = vrot.slane %v44, %v48
  %v51 = vmul.f32 %v42, %v49
  %v52 = vmul.f32 %v43, %v49
  %v53 = vld [vmem:[%s2] sm:$0x1]
  %v55 = vlaneseq
  %v56 = vshrl.u32 %v55, 7
  %v57 = vsub.s32 0, %v56
  %v58 = vrot.slane %v53, %v57
  %v60 = vadd.f32 %v51, %v58
  %v61 = vadd.f32 %v52, %v58
  %v62 = vpack.c.bf16 %v61, %v60
  %v64 = vunpack.c.l.b16 %v62
  %v65 = vunpack.c.h.b16 %v62
  %v66 = vpack.c.b16 %v64, %v64
  %v67 = vpack.c.b16 %v65, %v65
  %vm70 = vcmask 257024
  %71 = vst.msk [vmem:[%s3] sm:$0xf] %vm70, %v66
  %72 = vst.msk [vmem:[%s3 + $0x4] sm:$0xf] %vm70, %v67
  // Predicated region
  $region14: #{_prompt_bert_core.18} parent=0 // pred_check
    _
  $region15: #{_prompt_bert_core.18} parent=0 // pred_check_branch
    %74 = sbr.rel (0) target = $region17
  $region16: #{_prompt_bert_core.18} parent=0 // pred_region
    _
  $region17: #{_prompt_bert_core.18} parent=0 // pred_fallthru
    _
  // Predicated region
  $region18: #{_prompt_bert_core.18} parent=0 // pred_check
    _
  $region19: #{_prompt_bert_core.18} parent=0 // pred_check_branch
    %76 = sbr.rel (0) target = $region21
  $region20: #{_prompt_bert_core.18} parent=0 // pred_region
    _
  $region21: #{_prompt_bert_core.18} parent=0 // pred_fallthru
    _

// kernel: _prompt_bert_core.19
$region0: #{_prompt_bert_core.19}
  #allocation0 [shape = 'u32[]', space=smem, size = 0x4, offset = 0x4, fixed_abs, tag = 'smem constant byte address 0x4 - core index']
  #allocation1 [shape = 'u32[144,128]{1,0:T(1,128)}', space=vmem, size = 0x12000, scoped, tag = 'internal scratch']
  #allocation2 [shape = 'f32[16,128]{1,0:T(8,128)}', space=vmem, size = 0x2000, scoped, tag = 'scratch operand']
  %s0 = inlined_call_operand.vmem [shape: bf16[16,128], index: 0, kind: input, shape index: {}]
  %s1 = inlined_call_operand.vmem [shape: bf16[128,128], index: 1, kind: input, shape index: {}]
  %s2 = inlined_call_operand.vmem [shape: f32[1,128], index: 2, kind: input, shape index: {}]
  %s3 = inlined_call_operand.vmem [shape: bf16[16,128], index: 3, kind: output, shape index: {}]
  %s4 = sld [smem:[#allocation0]]
  $region30: #{_prompt_bert_core.19} parent=0
    _
  %s6 = ssub.s32 1, %s4
  %s7 = scalar_select 0, %s6, %s4
  // Predicated region
  $region2: #{_prompt_bert_core.19} parent=0 // pred_check
    _
  $region3: #{_prompt_bert_core.19} parent=0 // pred_check_branch
    %9 = sbr.rel (0) target = $region5
  $region4: #{_prompt_bert_core.19} parent=0 // pred_region
    _
  $region5: #{_prompt_bert_core.19} parent=0 // pred_fallthru
    _
  // Predicated region
  $region6: #{_prompt_bert_core.19} parent=0 // pred_check
    _
  $region7: #{_prompt_bert_core.19} parent=0 // pred_check_branch
    %11 = sbr.rel (0) target = $region9
  $region8: #{_prompt_bert_core.19} parent=0 // pred_region
    _
  $region9: #{_prompt_bert_core.19} parent=0 // pred_fallthru
    _
  // Predicated region
  $region10: #{_prompt_bert_core.19} parent=0 // pred_check
    _
  $region11: #{_prompt_bert_core.19} parent=0 // pred_check_branch
    %13 = sbr.rel (0) target = $region13
  $region12: #{_prompt_bert_core.19} parent=0 // pred_region
    _
  $region13: #{_prompt_bert_core.19} parent=0 // pred_fallthru
    _
  %p15 = scmp.eq.s32.totalorder 0, 0
  // Predicated region
  $region14: #{_prompt_bert_core.19} parent=0 // pred_check
    %p16 = pneg %p15
  $region15: #{_prompt_bert_core.19} parent=0 // pred_check_branch
    %18 = sbr.rel (%p16) target = $region17
  $region16: #{_prompt_bert_core.19} parent=0 // pred_region
    %19 = vst [vmem:[#allocation2] sm:$0xff] 0.0
    %20 = vst [vmem:[#allocation2 + $0x8] sm:$0xff] 0.0
  $region17: #{_prompt_bert_core.19} parent=0 // pred_fallthru
    _
  %v21 = vld [vmem:[#allocation2] sm:$0xff]
  %v22 = vld [vmem:[#allocation2 + $0x8] sm:$0xff]
  %v23 = vld [vmem:[%s0] sm:$0xf]
  %v24 = vld [vmem:[%s0 + $0x4] sm:$0xf]
  %v25 = vld [vmem:[%s1] sm:$0xf]
  %v26 = vld [vmem:[%s1 + $0x4] sm:$0xf]
  %v27 = vld [vmem:[%s1 + $0x8] sm:$0xf]
  %v28 = vld [vmem:[%s1 + $0xc] sm:$0xf]
  %v29 = vld [vmem:[%s1 + $0x10] sm:$0xf]
  %v30 = vld [vmem:[%s1 + $0x14] sm:$0xf]
  %v31 = vld [vmem:[%s1 + $0x18] sm:$0xf]
  %v32 = vld [vmem:[%s1 + $0x1c] sm:$0xf]
  %v33 = vld [vmem:[%s1 + $0x20] sm:$0xf]
  %v34 = vld [vmem:[%s1 + $0x24] sm:$0xf]
  %v35 = vld [vmem:[%s1 + $0x28] sm:$0xf]
  %v36 = vld [vmem:[%s1 + $0x2c] sm:$0xf]
  %v37 = vld [vmem:[%s1 + $0x30] sm:$0xf]
  %v38 = vld [vmem:[%s1 + $0x34] sm:$0xf]
  %v39 = vld [vmem:[%s1 + $0x38] sm:$0xf]
  %v40 = vld [vmem:[%s1 + $0x3c] sm:$0xf]
  %v43 = vunpack.c.l.b16 %v23
  %v44 = vunpack.c.l.b16 %v24
  %v45 = vpack.c.b16 %v44, %v43
  %v63 = vunpack.c.l.b16 %v25
  %v64 = vunpack.c.l.b16 %v26
  %v65 = vunpack.c.l.b16 %v27
  %v66 = vunpack.c.l.b16 %v28
  %v67 = vunpack.c.l.b16 %v29
  %v68 = vunpack.c.l.b16 %v30
  %v69 = vunpack.c.l.b16 %v31
  %v70 = vunpack.c.l.b16 %v32
  %v71 = vunpack.c.l.b16 %v33
  %v72 = vunpack.c.l.b16 %v34
  %v73 = vunpack.c.l.b16 %v35
  %v74 = vunpack.c.l.b16 %v36
  %v75 = vunpack.c.l.b16 %v37
  %v76 = vunpack.c.l.b16 %v38
  %v77 = vunpack.c.l.b16 %v39
  %v78 = vunpack.c.l.b16 %v40
  %v79 = vpack.c.b16 %v64, %v63
  %v80 = vpack.c.b16 %v66, %v65
  %v81 = vpack.c.b16 %v68, %v67
  %v82 = vpack.c.b16 %v70, %v69
  %v83 = vpack.c.b16 %v72, %v71
  %v84 = vpack.c.b16 %v74, %v73
  %v85 = vpack.c.b16 %v76, %v75
  %v86 = vpack.c.b16 %v78, %v77
  %95 = vmatprep.subr.bf16.mxu0 0
  %96 = vmatpush1.bf16.msra.mxu0 %v86
  %97 = vmatprep.subr.bf16.mxu0 0
  %98 = vmatpush1.bf16.msra.mxu0 %v85
  %99 = vmatprep.subr.bf16.mxu0 0
  %100 = vmatpush1.bf16.msra.mxu0 %v84
  %101 = vmatprep.subr.bf16.mxu0 0
  %102 = vmatpush1.bf16.msra.mxu0 %v83
  %103 = vmatprep.subr.bf16.mxu0 0
  %104 = vmatpush1.bf16.msra.mxu0 %v82
  %105 = vmatprep.subr.bf16.mxu0 0
  %106 = vmatpush1.bf16.msra.mxu0 %v81
  %107 = vmatprep.subr.bf16.mxu0 0
  %108 = vmatpush1.bf16.msra.mxu0 %v80
  %109 = vmatprep.subr.bf16.mxu0 0
  %110 = vmatpush1.bf16.msra.mxu0 %v79
  %111 = vmatprep.subr.bf16.mxu0 0
  %112 = vmatpush2.bf16.msra.mxu0 0
  %113 = vmatprep.subr.bf16.mxu0 0
  %114 = vmatpush2.bf16.msra.mxu0 0
  %115 = vmatprep.subr.bf16.mxu0 0
  %116 = vmatpush2.bf16.msra.mxu0 0
  %117 = vmatprep.subr.bf16.mxu0 0
  %118 = vmatpush2.bf16.msra.mxu0 0
  %119 = vmatprep.subr.bf16.mxu0 0
  %120 = vmatpush2.bf16.msra.mxu0 0
  %121 = vmatprep.subr.bf16.mxu0 0
  %122 = vmatpush2.bf16.msra.mxu0 0
  %123 = vmatprep.subr.bf16.mxu0 0
  %124 = vmatpush2.bf16.msra.mxu0 0
  %125 = vmatprep.subr.bf16.mxu0 0
  %126 = vmatpush2.bf16.msra.mxu0 0
  %127 = vmatprep.mubr.bf16.mxu0 0
  %128 = vmatmul.mubr.bf16.gmra.mxu0 %v45
  %v129 = vpop.f32.mrf.mxu0
  %v130 = vadd.f32 0.0, %v129
  %v131 = vpop.f32.mrf.mxu0
  %v132 = vpop.f32.mrf.mxu0
  %v133 = vadd.f32 0.0, %v132
  %v134 = vpop.f32.mrf.mxu0
  %135 = vdwg.mxu0
  %v136 = vadd.f32 %v21, %v130
  %v137 = vadd.f32 %v22, %v133
  %138 = vst [vmem:[#allocation2] sm:$0xff] %v136
  %139 = vst [vmem:[#allocation2 + $0x8] sm:$0xff] %v137
  // Predicated region
  $region18: #{_prompt_bert_core.19} parent=0 // pred_check
    %p140 = pneg %p15
  $region19: #{_prompt_bert_core.19} parent=0 // pred_check_branch
    %142 = sbr.rel (%p140) target = $region21
  $region20: #{_prompt_bert_core.19} parent=0 // pred_region
    %v143 = vld [vmem:[#allocation2] sm:$0xff]
    %v144 = vld [vmem:[#allocation2 + $0x8] sm:$0xff]
    %v145 = vld [vmem:[%s2] sm:$0x1]
    %v147 = vlaneseq
    %v148 = vshrl.u32 %v147, 7
    %v149 = vsub.s32 0, %v148
    %v150 = vrot.slane %v145, %v149
    %v152 = vadd.f32 %v143, %v150
    %v153 = vadd.f32 %v144, %v150
    %v154 = vpack.c.bf16 %v153, %v152
    %v156 = vunpack.c.l.b16 %v154
    %v157 = vunpack.c.h.b16 %v154
    %v158 = vpack.c.b16 %v156, %v156
    %v159 = vpack.c.b16 %v157, %v157
    %162 = vst [vmem:[%s3] sm:$0xf] %v158
    %163 = vst [vmem:[%s3 + $0x4] sm:$0xf] %v159
  $region21: #{_prompt_bert_core.19} parent=0 // pred_fallthru
    _
  // Predicated region
  $region22: #{_prompt_bert_core.19} parent=0 // pred_check
    _
  $region23: #{_prompt_bert_core.19} parent=0 // pred_check_branch
    %165 = sbr.rel (0) target = $region25
  $region24: #{_prompt_bert_core.19} parent=0 // pred_region
    _
  $region25: #{_prompt_bert_core.19} parent=0 // pred_fallthru
    _
  // Predicated region
  $region26: #{_prompt_bert_core.19} parent=0 // pred_check
    _
  $region27: #{_prompt_bert_core.19} parent=0 // pred_check_branch
    %167 = sbr.rel (0) target = $region29
  $region28: #{_prompt_bert_core.19} parent=0 // pred_region
    _
  $region29: #{_prompt_bert_core.19} parent=0 // pred_fallthru
    _

// kernel: _prompt_bert_core.22
$region0: #{_prompt_bert_core.22}
  #allocation0 [shape = 'u32[]', space=smem, size = 0x4, offset = 0x4, fixed_abs, tag = 'smem constant byte address 0x4 - core index']
  #allocation1 [shape = 'u32[144,128]{1,0:T(1,128)}', space=vmem, size = 0x12000, scoped, tag = 'internal scratch']
  %s0 = inlined_call_operand.vmem [shape: bf16[16,32], index: 0, kind: input, shape index: {}]
  %s1 = inlined_call_operand.vmem [shape: bf16[16,32], index: 1, kind: input, shape index: {}]
  %s2 = inlined_call_operand.vmem [shape: f32[1,32], index: 2, kind: input, shape index: {}]
  %s3 = inlined_call_operand.vmem [shape: f32[1,32], index: 3, kind: input, shape index: {}]
  %s4 = inlined_call_operand.vmem [shape: bf16[16,32], index: 4, kind: output, shape index: {}]
  %s5 = sld [smem:[#allocation0]]
  $region26: #{_prompt_bert_core.22} parent=0
    _
  %s7 = ssub.s32 1, %s5
  %s8 = scalar_select 0, %s7, %s5
  // Predicated region
  $region2: #{_prompt_bert_core.22} parent=0 // pred_check
    _
  $region3: #{_prompt_bert_core.22} parent=0 // pred_check_branch
    %10 = sbr.rel (0) target = $region5
  $region4: #{_prompt_bert_core.22} parent=0 // pred_region
    _
  $region5: #{_prompt_bert_core.22} parent=0 // pred_fallthru
    _
  // Predicated region
  $region6: #{_prompt_bert_core.22} parent=0 // pred_check
    _
  $region7: #{_prompt_bert_core.22} parent=0 // pred_check_branch
    %12 = sbr.rel (0) target = $region9
  $region8: #{_prompt_bert_core.22} parent=0 // pred_region
    _
  $region9: #{_prompt_bert_core.22} parent=0 // pred_fallthru
    _
  // Predicated region
  $region10: #{_prompt_bert_core.22} parent=0 // pred_check
    _
  $region11: #{_prompt_bert_core.22} parent=0 // pred_check_branch
    %14 = sbr.rel (0) target = $region13
  $region12: #{_prompt_bert_core.22} parent=0 // pred_region
    _
  $region13: #{_prompt_bert_core.22} parent=0 // pred_fallthru
    _
  // Predicated region
  $region14: #{_prompt_bert_core.22} parent=0 // pred_check
    _
  $region15: #{_prompt_bert_core.22} parent=0 // pred_check_branch
    %16 = sbr.rel (0) target = $region17
  $region16: #{_prompt_bert_core.22} parent=0 // pred_region
    _
  $region17: #{_prompt_bert_core.22} parent=0 // pred_fallthru
    _
  %v17 = vld [vmem:[%s0] sm:$0xf]
  %v18 = vld [vmem:[%s0 + $0x4] sm:$0xf]
  %v19 = vunpack.c.l.bf16 %v17
  %v20 = vunpack.c.l.bf16 %v18
  %v21 = vld [vmem:[%s1] sm:$0xf]
  %v22 = vld [vmem:[%s1 + $0x4] sm:$0xf]
  %v23 = vunpack.c.l.bf16 %v21
  %v24 = vunpack.c.l.bf16 %v22
  %v25 = vadd.f32 %v19, %v23
  %v26 = vadd.f32 %v20, %v24
  %vm27 = vcmask 261120
  %v28 = vsel %vm27, %v25, 0.0
  %29 = vadd.xlane.f32.xlu0 %v28
  %v30 = vpop.xlane.xlu0 %29
  %v31 = vsel %vm27, %v26, 0.0
  %32 = vadd.xlane.f32.xlu0 %v31
  %v33 = vpop.xlane.xlu0 %32
  %v34 = vrcp.pop 32.0
  %v35 = vmul.f32 %v30, %v34
  %v36 = vmul.f32 %v33, %v34
  %v37 = vsub.f32 %v25, %v35
  %v38 = vsub.f32 %v26, %v36
  %v39 = vmul.f32 %v37, %v37
  %v40 = vmul.f32 %v38, %v38
  %v41 = vsel %vm27, %v39, 0.0
  %42 = vadd.xlane.f32.xlu0 %v41
  %v43 = vpop.xlane.xlu0 %42
  %v44 = vsel %vm27, %v40, 0.0
  %45 = vadd.xlane.f32.xlu0 %v44
  %v46 = vpop.xlane.xlu0 %45
  %v47 = vmul.f32 %v43, %v34
  %v48 = vmul.f32 %v46, %v34
  %v49 = vadd.f32 %v47, 1e-12
  %v50 = vadd.f32 %v48, 1e-12
  %v51 = vrsqrt.pop %v49
  %v52 = vrsqrt.pop %v50
  %v53 = vmul.f32 %v37, %v51
  %v54 = vmul.f32 %v38, %v52
  %v55 = vld [vmem:[%s2] sm:$0x1]
  %v57 = vlaneseq
  %v58 = vshrl.u32 %v57, 7
  %v59 = vsub.s32 0, %v58
  %v60 = vrot.slane %v55, %v59
  %v62 = vmul.f32 %v53, %v60
  %v63 = vmul.f32 %v54, %v60
  %v64 = vld [vmem:[%s3] sm:$0x1]
  %v66 = vlaneseq
  %v67 = vshrl.u32 %v66, 7
  %v68 = vsub.s32 0, %v67
  %v69 = vrot.slane %v64, %v68
  %v71 = vadd.f32 %v62, %v69
  %v72 = vadd.f32 %v63, %v69
  %v73 = vpack.c.bf16 %v72, %v71
  %v75 = vunpack.c.l.b16 %v73
  %v76 = vunpack.c.h.b16 %v73
  %v77 = vpack.c.b16 %v75, %v75
  %v78 = vpack.c.b16 %v76, %v76
  %vm81 = vcmask 257024
  %82 = vst.msk [vmem:[%s4] sm:$0xf] %vm81, %v77
  %83 = vst.msk [vmem:[%s4 + $0x4] sm:$0xf] %vm81, %v78
  // Predicated region
  $region18: #{_prompt_bert_core.22} parent=0 // pred_check
    _
  $region19: #{_prompt_bert_core.22} parent=0 // pred_check_branch
    %85 = sbr.rel (0) target = $region21
  $region20: #{_prompt_bert_core.22} parent=0 // pred_region
    _
  $region21: #{_prompt_bert_core.22} parent=0 // pred_fallthru
    _
  // Predicated region
  $region22: #{_prompt_bert_core.22} parent=0 // pred_check
    _
  $region23: #{_prompt_bert_core.22} parent=0 // pred_check_branch
    %87 = sbr.rel (0) target = $region25
  $region24: #{_prompt_bert_core.22} parent=0 // pred_region
    _
  $region25: #{_prompt_bert_core.22} parent=0 // pred_fallthru
    _

// kernel: _prompt_bert_core.20
$region0: #{_prompt_bert_core.20}
  #allocation0 [shape = 'u32[]', space=smem, size = 0x4, offset = 0x4, fixed_abs, tag = 'smem constant byte address 0x4 - core index']
  #allocation1 [shape = 'u32[144,128]{1,0:T(1,128)}', space=vmem, size = 0x12000, scoped, tag = 'internal scratch']
  %s0 = inlined_call_operand.vmem [shape: bf16[2,8,96], index: 0, kind: input, shape index: {}]
  %s1 = inlined_call_operand.vmem [shape: f32[2,1,8], index: 1, kind: input, shape index: {}]
  %s2 = inlined_call_operand.vmem [shape: bf16[2,8,32], index: 2, kind: output, shape index: {}]
  %s3 = sld [smem:[#allocation0]]
  $region41: #{_prompt_bert_core.20} parent=0
    _
  %s5 = ssub.s32 1, %s3
  %s6 = scalar_select 0, %s5, %s3
  loop: start=0, step=1, limit=4
  $region2: #{_prompt_bert_core.20} parent=0 // loop_pre_header
    _
  $region3: #{_prompt_bert_core.20} parent=0 // loop_header
    %s8 = sphi 0, %s12
    %p9 = scmp.ge.s32.totalorder %s8, 4
    %s18 = sphi 0, %s20
    %s21 = sphi 0, %s18
    %s22 = sphi 0, %s21
    %s38 = sphi 0, %s22
    %s44 = sphi 0, %s46
    %s47 = sphi 0, %s44
    %s48 = sphi 0, %s47
    %s64 = sphi 0, %s48
    %s70 = sphi 0, %s72
    %s73 = sphi 0, %s70
    %s74 = sphi 0, %s73
    %s90 = sphi 0, %s74
  $region4: #{_prompt_bert_core.20} parent=0 // loop_header_branch
    %11 = sbr.rel (%p9) target = $region8
  $region5: #{_prompt_bert_core.20} parent=0 // loop_body
    %s13 = ssub.s32 %s8, 1
    %s14 = ssub.s32 %s8, 2
    %s15 = sadd.s32 %s8, 1
    %s16 = ssub.s32 %s8, %s15
    %p17 = scmp.eq.s32.totalorder %s16, 0
    %s19 = sadd.s32 %s18, 1
    %s20 = scalar_select %p17, %s18, %s19
    %p23 = pneg %p17
    %p24 = scmp.eq.s32.totalorder %s8, 1
    %p25 = por %p23, %p24
    %p26 = scmp.ne.s32.totalorder %s18, %s21
    %p27 = scmp.eq.s32.totalorder %s8, 0
    %p28 = por %p26, %p27
    %p29 = scmp.ne.s32.totalorder %s18, %s21
    %p30 = scmp.eq.s32.totalorder %s13, 1
    %p31 = por %p29, %p30
    %p32 = scmp.ne.s32.totalorder %s21, %s22
    %p33 = scmp.eq.s32.totalorder %s13, 0
    %p34 = por %p32, %p33
    %p35 = scmp.ne.s32.totalorder %s21, %s22
    %p36 = scmp.eq.s32.totalorder %s14, 1
    %p37 = por %p35, %p36
    %p39 = scmp.ne.s32.totalorder %s22, %s38
    %p40 = scmp.eq.s32.totalorder %s14, 0
    %p41 = por %p39, %p40
    %s42 = ssub.s32 %s8, %s15
    %p43 = scmp.eq.s32.totalorder %s42, 0
    %s45 = sadd.s32 %s44, 1
    %s46 = scalar_select %p43, %s44, %s45
    %p49 = pneg %p43
    %p50 = scmp.eq.s32.totalorder %s8, 1
    %p51 = por %p49, %p50
    %p52 = scmp.ne.s32.totalorder %s44, %s47
    %p53 = scmp.eq.s32.totalorder %s8, 0
    %p54 = por %p52, %p53
    %p55 = scmp.ne.s32.totalorder %s44, %s47
    %p56 = scmp.eq.s32.totalorder %s13, 1
    %p57 = por %p55, %p56
    %p58 = scmp.ne.s32.totalorder %s47, %s48
    %p59 = scmp.eq.s32.totalorder %s13, 0
    %p60 = por %p58, %p59
    %p61 = scmp.ne.s32.totalorder %s47, %s48
    %p62 = scmp.eq.s32.totalorder %s14, 1
    %p63 = por %p61, %p62
    %p65 = scmp.ne.s32.totalorder %s48, %s64
    %p66 = scmp.eq.s32.totalorder %s14, 0
    %p67 = por %p65, %p66
    %s68 = ssub.s32 %s8, %s15
    %p69 = scmp.eq.s32.totalorder %s68, 0
    %s71 = sadd.s32 %s70, 1
    %s72 = scalar_select %p69, %s70, %s71
    %p75 = pneg %p69
    %p76 = scmp.eq.s32.totalorder %s8, 1
    %p77 = por %p75, %p76
    %p78 = scmp.ne.s32.totalorder %s70, %s73
    %p79 = scmp.eq.s32.totalorder %s8, 0
    %p80 = por %p78, %p79
    %p81 = scmp.ne.s32.totalorder %s70, %s73
    %p82 = scmp.eq.s32.totalorder %s13, 1
    %p83 = por %p81, %p82
    %p84 = scmp.ne.s32.totalorder %s73, %s74
    %p85 = scmp.eq.s32.totalorder %s13, 0
    %p86 = por %p84, %p85
    %p87 = scmp.ne.s32.totalorder %s73, %s74
    %p88 = scmp.eq.s32.totalorder %s14, 1
    %p89 = por %p87, %p88
    %p91 = scmp.ne.s32.totalorder %s74, %s90
    %p92 = scmp.eq.s32.totalorder %s14, 0
    %p93 = por %p91, %p92
    %p94 = scmp.le.s32.totalorder 1, %s8
    %p95 = scmp.lt.s32.totalorder %s8, 3
    %p96 = pnand %p94, %p95
    %p97 = pneg %p96
    // Predicated region
    $region9: #{_prompt_bert_core.20} parent=5 // pred_check
      _
    $region10: #{_prompt_bert_core.20} parent=5 // pred_check_branch
      %99 = sbr.rel (%p96) target = $region12
    $region11: #{_prompt_bert_core.20} parent=5 // pred_region
      %s100 = ssub.s32 %s8, 1
    $region12: #{_prompt_bert_core.20} parent=5 // pred_fallthru
      _
    %p101 = scmp.lt.s32.totalorder %s8, 2
    // Predicated region
    $region13: #{_prompt_bert_core.20} parent=5 // pred_check
      %p102 = pneg %p101
    $region14: #{_prompt_bert_core.20} parent=5 // pred_check_branch
      %104 = sbr.rel (%p102) target = $region16
    $region15: #{_prompt_bert_core.20} parent=5 // pred_region
      // Predicated region
      $region17: #{_prompt_bert_core.20} parent=15 // pred_check
        %p105 = pneg %p28
      $region18: #{_prompt_bert_core.20} parent=15 // pred_check_branch
        %107 = sbr.rel (%p105) target = $region20
      $region19: #{_prompt_bert_core.20} parent=15 // pred_region
        %p108 = scmp.lt.s32.totalorder %s8, 1
        %s109 = scalar_select %p108, %s8, 1
        %s110 = smul.addr %s109, 4
        %s111 = scalar_lea.vmem %s0, %s110
      $region20: #{_prompt_bert_core.20} parent=15 // pred_fallthru
        _
      // Predicated region
      $region21: #{_prompt_bert_core.20} parent=15 // pred_check
        %p112 = pneg %p54
      $region22: #{_prompt_bert_core.20} parent=15 // pred_check_branch
        %114 = sbr.rel (%p112) target = $region24
      $region23: #{_prompt_bert_core.20} parent=15 // pred_region
        %p115 = scmp.lt.s32.totalorder %s8, 1
        %s116 = scalar_select %p115, %s8, 1
        %s117 = scalar_lea.vmem %s1, %s116
      $region24: #{_prompt_bert_core.20} parent=15 // pred_fallthru
        _
    $region16: #{_prompt_bert_core.20} parent=5 // pred_fallthru
      _
    %p118 = scmp.le.s32.totalorder 1, %s8
    %p119 = scmp.lt.s32.totalorder %s8, 3
    %p120 = pnand %p118, %p119
    %p121 = pneg %p120
    // Predicated region
    $region25: #{_prompt_bert_core.20} parent=5 // pred_check
      _
    $region26: #{_prompt_bert_core.20} parent=5 // pred_check_branch
      %123 = sbr.rel (%p120) target = $region28
    $region27: #{_prompt_bert_core.20} parent=5 // pred_region
      %s124 = ssub.s32 %s8, 1
      %p125 = scmp.lt.s32.totalorder %s13, 1
      %s126 = scalar_select %p125, %s13, 1
      %s127 = smul.addr %s126, 4
      %s128 = scalar_lea.vmem %s0, %s127
      %p129 = pneg %p34
      %p130 = pneg %p31
      %p131 = scmp.lt.s32.totalorder %s13, 1
      %s132 = scalar_select %p131, %s13, 1
      %s133 = scalar_lea.vmem %s1, %s132
      %p134 = pneg %p60
      %p135 = pneg %p57
      %p136 = pneg %p86
      %p137 = pneg %p83
      %p138 = scmp.lt.s32.totalorder %s13, 1
      %s139 = scalar_select %p138, %s13, 1
      %s140 = smul.addr %s139, 4
      %s141 = scalar_lea.vmem %s2, %s140
      %p142 = scmp.lt.s32.totalorder %s13, 1
      %s143 = scalar_select %p142, %s13, 1
      %s144 = smul.addr %s143, 4
      %s145 = scalar_lea.vmem %s0, %s144
      %p146 = scmp.lt.s32.totalorder %s13, 1
      %s147 = scalar_select %p146, %s13, 1
      %s148 = scalar_lea.vmem %s1, %s147
      %p149 = scmp.lt.s32.totalorder %s13, 1
      %s150 = scalar_select %p149, %s13, 1
      %s151 = smul.addr %s150, 4
      %s152 = scalar_lea.vmem %s2, %s151
      %v154 = vld [vmem:[%s145] sm:$0xf]
      %v155 = vld [vmem:[%s148] sm:$0x1]
      %v157 = vlaneseq
      %v158 = vshrl.u32 %v157, 7
      %v159 = vsub.s32 0, %v158
      %v160 = vrot.slane %v155, %v159
      %v163 = vunpack.c.l.b16 %v154
      %v164 = vpack.c.b16 %v163, %v163
      %165 = vrot.lane.b32.xlu0 %v164, 96
      %v166 = vpop.permute.xlu0 %165
      %vm167 = vcmask 130048
      %v169 = vsel %vm167, %v154, 0
      %v172 = vsel %vm167, %v166, 0
      %174 = vmatprep.subr.bf16.mxu0 0
      %175 = vmatpush1.bf16.xpose.msra.mxu0 0
      %176 = vmatprep.subr.bf16.mxu0 0
      %177 = vmatpush1.bf16.xpose.msra.mxu0 0
      %178 = vmatprep.subr.bf16.mxu0 0
      %179 = vmatpush1.bf16.xpose.msra.mxu0 0
      %180 = vmatprep.subr.bf16.mxu0 0
      %181 = vmatpush1.bf16.xpose.msra.mxu0 0
      %182 = vmatprep.subr.bf16.mxu0 0
      %183 = vmatpush1.bf16.xpose.msra.mxu0 0
      %184 = vmatprep.subr.bf16.mxu0 0
      %185 = vmatpush1.bf16.xpose.msra.mxu0 0
      %186 = vmatprep.subr.bf16.mxu0 0
      %187 = vmatpush1.bf16.xpose.msra.mxu0 0
      %188 = vmatprep.subr.bf16.mxu0 0
      %189 = vmatpush1.bf16.xpose.msra.mxu0 %v172
      %190 = vmatprep.subr.bf16.mxu0 0
      %191 = vmatpush2.bf16.xpose.msra.mxu0 0
      %192 = vmatprep.subr.bf16.mxu0 0
      %193 = vmatpush2.bf16.xpose.msra.mxu0 0
      %194 = vmatprep.subr.bf16.mxu0 0
      %195 = vmatpush2.bf16.xpose.msra.mxu0 0
      %196 = vmatprep.subr.bf16.mxu0 0
      %197 = vmatpush2.bf16.xpose.msra.mxu0 0
      %198 = vmatprep.subr.bf16.mxu0 0
      %199 = vmatpush2.bf16.xpose.msra.mxu0 0
      %200 = vmatprep.subr.bf16.mxu0 0
      %201 = vmatpush2.bf16.xpose.msra.mxu0 0
      %202 = vmatprep.subr.bf16.mxu0 0
      %203 = vmatpush2.bf16.xpose.msra.mxu0 0
      %204 = vmatprep.subr.bf16.mxu0 0
      %205 = vmatpush2.bf16.xpose.msra.mxu0 0
      %206 = vmatprep.mubr.bf16.mxu0 0
      %207 = vmatmul.mubr.bf16.gmra.mxu0 %v169
      %v208 = vpop.f32.mrf.mxu0
      %v209 = vadd.f32 %v160, %v208
      %v210 = vpop.f32.mrf.mxu0
      %v211 = vpop.f32.mrf.mxu0
      %v212 = vpop.f32.mrf.mxu0
      %213 = vdwg.mxu0
      %vm214 = vcmask 64512
      %v215 = vsel %vm214, %v209, -inf
      %216 = vmax.xlane.f32.xlu0 %v215
      %v217 = vpop.xlane.xlu0 %216
      %v218 = vsub.f32 %v209, %v217
      %v219 = vmul.f32 %v218, 1.442695
      %v220 = vpow.pop %v219
      %v221 = vsel %vm214, %v220, 0.0
      %222 = vadd.xlane.f32.xlu0 %v221
      %v223 = vpop.xlane.xlu0 %222
      %v224 = vrcp.pop %v223
      %v225 = vmul.f32 %v220, %v224
      %v226 = vpack.c.bf16 %v225, %v225
      %227 = vrot.lane.b32.xlu0 %v164, 64
      %v228 = vpop.permute.xlu0 %227
      %v230 = vsel %vm214, %v226, 0
      %vm232 = vcmask 1043456
      %v234 = vsel %vm232, %v228, 0
      %236 = vmatprep.subr.bf16.mxu0 0
      %237 = vmatpush1.bf16.msra.mxu0 0
      %238 = vmatprep.subr.bf16.mxu0 0
      %239 = vmatpush1.bf16.msra.mxu0 0
      %240 = vmatprep.subr.bf16.mxu0 0
      %241 = vmatpush1.bf16.msra.mxu0 0
      %242 = vmatprep.subr.bf16.mxu0 0
      %243 = vmatpush1.bf16.msra.mxu0 0
      %244 = vmatprep.subr.bf16.mxu0 0
      %245 = vmatpush1.bf16.msra.mxu0 0
      %246 = vmatprep.subr.bf16.mxu0 0
      %247 = vmatpush1.bf16.msra.mxu0 0
      %248 = vmatprep.subr.bf16.mxu0 0
      %249 = vmatpush1.bf16.msra.mxu0 0
      %250 = vmatprep.subr.bf16.mxu0 0
      %251 = vmatpush1.bf16.msra.mxu0 %v234
      %252 = vmatprep.subr.bf16.mxu0 0
      %253 = vmatpush2.bf16.msra.mxu0 0
      %254 = vmatprep.subr.bf16.mxu0 0
      %255 = vmatpush2.bf16.msra.mxu0 0
      %256 = vmatprep.subr.bf16.mxu0 0
      %257 = vmatpush2.bf16.msra.mxu0 0
      %258 = vmatprep.subr.bf16.mxu0 0
      %259 = vmatpush2.bf16.msra.mxu0 0
      %260 = vmatprep.subr.bf16.mxu0 0
      %261 = vmatpush2.bf16.msra.mxu0 0
      %262 = vmatprep.subr.bf16.mxu0 0
      %263 = vmatpush2.bf16.msra.mxu0 0
      %264 = vmatprep.subr.bf16.mxu0 0
      %265 = vmatpush2.bf16.msra.mxu0 0
      %266 = vmatprep.subr.bf16.mxu0 0
      %267 = vmatpush2.bf16.msra.mxu0 0
      %268 = vmatprep.mubr.bf16.mxu0 0
      %269 = vmatmul.mubr.bf16.gmra.mxu0 %v230
      %v270 = vpop.f32.mrf.mxu0
      %v271 = vadd.f32 0.0, %v270
      %v272 = vpop.f32.mrf.mxu0
      %v273 = vpop.f32.mrf.mxu0
      %v274 = vpop.f32.mrf.mxu0
      %275 = vdwg.mxu0
      %276 = vrot.lane.b32.xlu0 %v164, 112
      %v277 = vpop.permute.xlu0 %276
      %278 = vrot.lane.b32.xlu0 %v164, 80
      %v279 = vpop.permute.xlu0 %278
      %v281 = vsel %vm167, %v277, 0
      %v284 = vsel %vm167, %v279, 0
      %286 = vmatprep.subr.bf16.mxu0 0
      %287 = vmatpush1.bf16.xpose.msra.mxu0 0
      %288 = vmatprep.subr.bf16.mxu0 0
      %289 = vmatpush1.bf16.xpose.msra.mxu0 0
      %290 = vmatprep.subr.bf16.mxu0 0
      %291 = vmatpush1.bf16.xpose.msra.mxu0 0
      %292 = vmatprep.subr.bf16.mxu0 0
      %293 = vmatpush1.bf16.xpose.msra.mxu0 0
      %294 = vmatprep.subr.bf16.mxu0 0
      %295 = vmatpush1.bf16.xpose.msra.mxu0 0
      %296 = vmatprep.subr.bf16.mxu0 0
      %297 = vmatpush1.bf16.xpose.msra.mxu0 0
      %298 = vmatprep.subr.bf16.mxu0 0
      %299 = vmatpush1.bf16.xpose.msra.mxu0 0
      %300 = vmatprep.subr.bf16.mxu0 0
      %301 = vmatpush1.bf16.xpose.msra.mxu0 %v284
      %302 = vmatprep.subr.bf16.mxu0 0
      %303 = vmatpush2.bf16.xpose.msra.mxu0 0
      %304 = vmatprep.subr.bf16.mxu0 0
      %305 = vmatpush2.bf16.xpose.msra.mxu0 0
      %306 = vmatprep.subr.bf16.mxu0 0
      %307 = vmatpush2.bf16.xpose.msra.mxu0 0
      %308 = vmatprep.subr.bf16.mxu0 0
      %309 = vmatpush2.bf16.xpose.msra.mxu0 0
      %310 = vmatprep.subr.bf16.mxu0 0
      %311 = vmatpush2.bf16.xpose.msra.mxu0 0
      %312 = vmatprep.subr.bf16.mxu0 0
      %313 = vmatpush2.bf16.xpose.msra.mxu0 0
      %314 = vmatprep.subr.bf16.mxu0 0
      %315 = vmatpush2.bf16.xpose.msra.mxu0 0
      %316 = vmatprep.subr.bf16.mxu0 0
      %317 = vmatpush2.bf16.xpose.msra.mxu0 0
      %318 = vmatprep.mubr.bf16.mxu0 0
      %319 = vmatmul.mubr.bf16.gmra.mxu0 %v281
      %v320 = vpop.f32.mrf.mxu0
      %v321 = vadd.f32 %v160, %v320
      %v322 = vpop.f32.mrf.mxu0
      %v323 = vpop.f32.mrf.mxu0
      %v324 = vpop.f32.mrf.mxu0
      %325 = vdwg.mxu0
      %v326 = vsel %vm214, %v321, -inf
      %327 = vmax.xlane.f32.xlu0 %v326
      %v328 = vpop.xlane.xlu0 %327
      %v329 = vsub.f32 %v321, %v328
      %v330 = vmul.f32 %v329, 1.442695
      %v331 = vpow.pop %v330
      %v332 = vsel %vm214, %v331, 0.0
      %333 = vadd.xlane.f32.xlu0 %v332
      %v334 = vpop.xlane.xlu0 %333
      %v335 = vrcp.pop %v334
      %v336 = vmul.f32 %v331, %v335
      %v337 = vpack.c.bf16 %v336, %v336
      %338 = vrot.lane.b32.xlu0 %v164, 48
      %v339 = vpop.permute.xlu0 %338
      %v341 = vsel %vm214, %v337, 0
      %v344 = vsel %vm232, %v339, 0
      %346 = vmatprep.subr.bf16.mxu0 0
      %347 = vmatpush1.bf16.msra.mxu0 0
      %348 = vmatprep.subr.bf16.mxu0 0
      %349 = vmatpush1.bf16.msra.mxu0 0
      %350 = vmatprep.subr.bf16.mxu0 0
      %351 = vmatpush1.bf16.msra.mxu0 0
      %352 = vmatprep.subr.bf16.mxu0 0
      %353 = vmatpush1.bf16.msra.mxu0 0
      %354 = vmatprep.subr.bf16.mxu0 0
      %355 = vmatpush1.bf16.msra.mxu0 0
      %356 = vmatprep.subr.bf16.mxu0 0
      %357 = vmatpush1.bf16.msra.mxu0 0
      %358 = vmatprep.subr.bf16.mxu0 0
      %359 = vmatpush1.bf16.msra.mxu0 0
      %360 = vmatprep.subr.bf16.mxu0 0
      %361 = vmatpush1.bf16.msra.mxu0 %v344
      %362 = vmatprep.subr.bf16.mxu0 0
      %363 = vmatpush2.bf16.msra.mxu0 0
      %364 = vmatprep.subr.bf16.mxu0 0
      %365 = vmatpush2.bf16.msra.mxu0 0
      %366 = vmatprep.subr.bf16.mxu0 0
      %367 = vmatpush2.bf16.msra.mxu0 0
      %368 = vmatprep.subr.bf16.mxu0 0
      %369 = vmatpush2.bf16.msra.mxu0 0
      %370 = vmatprep.subr.bf16.mxu0 0
      %371 = vmatpush2.bf16.msra.mxu0 0
      %372 = vmatprep.subr.bf16.mxu0 0
      %373 = vmatpush2.bf16.msra.mxu0 0
      %374 = vmatprep.subr.bf16.mxu0 0
      %375 = vmatpush2.bf16.msra.mxu0 0
      %376 = vmatprep.subr.bf16.mxu0 0
      %377 = vmatpush2.bf16.msra.mxu0 0
      %378 = vmatprep.mubr.bf16.mxu0 0
      %379 = vmatmul.mubr.bf16.gmra.mxu0 %v341
      %v380 = vpop.f32.mrf.mxu0
      %v381 = vadd.f32 0.0, %v380
      %v382 = vpop.f32.mrf.mxu0
      %v383 = vpop.f32.mrf.mxu0
      %v384 = vpop.f32.mrf.mxu0
      %385 = vdwg.mxu0
      %387 = vrot.lane.b32.xlu0 %v381, 16
      %v388 = vpop.permute.xlu0 %387
      %v390 = vsel %vm167, %v271, %v388
      %v391 = vpack.c.bf16 %v390, %v390
      %vm392 = vcmask 257024
      %393 = vst.msk [vmem:[%s152] sm:$0xf] %vm392, %v391
      %p394 = scmp.lt.s32.totalorder %s13, 1
      %s395 = scalar_select %p394, %s13, 1
      %s396 = smul.addr %s395, 4
      %s397 = scalar_lea.vmem %s2, %s396
      // Predicated region
      $region29: #{_prompt_bert_core.20} parent=27 // pred_check
        %p398 = pneg %p83
      $region30: #{_prompt_bert_core.20} parent=27 // pred_check_branch
        %400 = sbr.rel (%p398) target = $region32
      $region31: #{_prompt_bert_core.20} parent=27 // pred_region
        _
      $region32: #{_prompt_bert_core.20} parent=27 // pred_fallthru
        _
    $region28: #{_prompt_bert_core.20} parent=5 // pred_fallthru
      _
    %p401 = scmp.le.s32.totalorder 2, %s8
    // Predicated region
    $region33: #{_prompt_bert_core.20} parent=5 // pred_check
      %p402 = pneg %p401
    $region34: #{_prompt_bert_core.20} parent=5 // pred_check_branch
      %404 = sbr.rel (%p402) target = $region36
    $region35: #{_prompt_bert_core.20} parent=5 // pred_region
      %s405 = ssub.s32 %s8, 2
      // Predicated region
      $region37: #{_prompt_bert_core.20} parent=35 // pred_check
        %p406 = pneg %p89
      $region38: #{_prompt_bert_core.20} parent=35 // pred_check_branch
        %408 = sbr.rel (%p406) target = $region40
      $region39: #{_prompt_bert_core.20} parent=35 // pred_region
        %p409 = scmp.lt.s32.totalorder %s14, 1
        %s410 = scalar_select %p409, %s14, 1
        %s411 = smul.addr %s410, 4
        %s412 = scalar_lea.vmem %s2, %s411
      $region40: #{_prompt_bert_core.20} parent=35 // pred_fallthru
        _
    $region36: #{_prompt_bert_core.20} parent=5 // pred_fallthru
      _
  $region6: #{_prompt_bert_core.20} parent=0 // loop_footer
    %s12 = sadd.s32 1, %s8
  $region7: #{_prompt_bert_core.20} parent=0 // loop_footer_branch
    %7 = sbr.rel target = $region3
  $region8: #{_prompt_bert_core.20} parent=0 // loop_exit
    _

// kernel: _prompt_bert_core.23
$region0: #{_prompt_bert_core.23}
  #allocation0 [shape = 'u32[]', space=smem, size = 0x4, offset = 0x4, fixed_abs, tag = 'smem constant byte address 0x4 - core index']
  #allocation1 [shape = 'u32[144,128]{1,0:T(1,128)}', space=vmem, size = 0x12000, scoped, tag = 'internal scratch']
  #allocation2 [shape = 'f32[16,128]{1,0:T(8,128)}', space=vmem, size = 0x2000, scoped, tag = 'scratch operand']
  %s0 = inlined_call_operand.vmem [shape: bf16[16,128], index: 0, kind: input, shape index: {}]
  %s1 = inlined_call_operand.vmem [shape: bf16[128,128], index: 1, kind: input, shape index: {}]
  %s2 = inlined_call_operand.vmem [shape: f32[1,128], index: 2, kind: input, shape index: {}]
  %s3 = inlined_call_operand.vmem [shape: bf16[16,128], index: 3, kind: output, shape index: {}]
  %s4 = sld [smem:[#allocation0]]
  $region30: #{_prompt_bert_core.23} parent=0
    _
  %s6 = ssub.s32 1, %s4
  %s7 = scalar_select 0, %s6, %s4
  // Predicated region
  $region2: #{_prompt_bert_core.23} parent=0 // pred_check
    _
  $region3: #{_prompt_bert_core.23} parent=0 // pred_check_branch
    %9 = sbr.rel (0) target = $region5
  $region4: #{_prompt_bert_core.23} parent=0 // pred_region
    _
  $region5: #{_prompt_bert_core.23} parent=0 // pred_fallthru
    _
  // Predicated region
  $region6: #{_prompt_bert_core.23} parent=0 // pred_check
    _
  $region7: #{_prompt_bert_core.23} parent=0 // pred_check_branch
    %11 = sbr.rel (0) target = $region9
  $region8: #{_prompt_bert_core.23} parent=0 // pred_region
    _
  $region9: #{_prompt_bert_core.23} parent=0 // pred_fallthru
    _
  // Predicated region
  $region10: #{_prompt_bert_core.23} parent=0 // pred_check
    _
  $region11: #{_prompt_bert_core.23} parent=0 // pred_check_branch
    %13 = sbr.rel (0) target = $region13
  $region12: #{_prompt_bert_core.23} parent=0 // pred_region
    _
  $region13: #{_prompt_bert_core.23} parent=0 // pred_fallthru
    _
  %p15 = scmp.eq.s32.totalorder 0, 0
  // Predicated region
  $region14: #{_prompt_bert_core.23} parent=0 // pred_check
    %p16 = pneg %p15
  $region15: #{_prompt_bert_core.23} parent=0 // pred_check_branch
    %18 = sbr.rel (%p16) target = $region17
  $region16: #{_prompt_bert_core.23} parent=0 // pred_region
    %19 = vst [vmem:[#allocation2] sm:$0xff] 0.0
    %20 = vst [vmem:[#allocation2 + $0x8] sm:$0xff] 0.0
  $region17: #{_prompt_bert_core.23} parent=0 // pred_fallthru
    _
  %v21 = vld [vmem:[#allocation2] sm:$0xff]
  %v22 = vld [vmem:[#allocation2 + $0x8] sm:$0xff]
  %v23 = vld [vmem:[%s0] sm:$0xf]
  %v24 = vld [vmem:[%s0 + $0x4] sm:$0xf]
  %v25 = vld [vmem:[%s1] sm:$0xf]
  %v26 = vld [vmem:[%s1 + $0x4] sm:$0xf]
  %v27 = vld [vmem:[%s1 + $0x8] sm:$0xf]
  %v28 = vld [vmem:[%s1 + $0xc] sm:$0xf]
  %v29 = vld [vmem:[%s1 + $0x10] sm:$0xf]
  %v30 = vld [vmem:[%s1 + $0x14] sm:$0xf]
  %v31 = vld [vmem:[%s1 + $0x18] sm:$0xf]
  %v32 = vld [vmem:[%s1 + $0x1c] sm:$0xf]
  %v33 = vld [vmem:[%s1 + $0x20] sm:$0xf]
  %v34 = vld [vmem:[%s1 + $0x24] sm:$0xf]
  %v35 = vld [vmem:[%s1 + $0x28] sm:$0xf]
  %v36 = vld [vmem:[%s1 + $0x2c] sm:$0xf]
  %v37 = vld [vmem:[%s1 + $0x30] sm:$0xf]
  %v38 = vld [vmem:[%s1 + $0x34] sm:$0xf]
  %v39 = vld [vmem:[%s1 + $0x38] sm:$0xf]
  %v40 = vld [vmem:[%s1 + $0x3c] sm:$0xf]
  %v43 = vunpack.c.l.b16 %v23
  %v44 = vunpack.c.l.b16 %v24
  %v45 = vpack.c.b16 %v44, %v43
  %v63 = vunpack.c.l.b16 %v25
  %v64 = vunpack.c.l.b16 %v26
  %v65 = vunpack.c.l.b16 %v27
  %v66 = vunpack.c.l.b16 %v28
  %v67 = vunpack.c.l.b16 %v29
  %v68 = vunpack.c.l.b16 %v30
  %v69 = vunpack.c.l.b16 %v31
  %v70 = vunpack.c.l.b16 %v32
  %v71 = vunpack.c.l.b16 %v33
  %v72 = vunpack.c.l.b16 %v34
  %v73 = vunpack.c.l.b16 %v35
  %v74 = vunpack.c.l.b16 %v36
  %v75 = vunpack.c.l.b16 %v37
  %v76 = vunpack.c.l.b16 %v38
  %v77 = vunpack.c.l.b16 %v39
  %v78 = vunpack.c.l.b16 %v40
  %v79 = vpack.c.b16 %v64, %v63
  %v80 = vpack.c.b16 %v66, %v65
  %v81 = vpack.c.b16 %v68, %v67
  %v82 = vpack.c.b16 %v70, %v69
  %v83 = vpack.c.b16 %v72, %v71
  %v84 = vpack.c.b16 %v74, %v73
  %v85 = vpack.c.b16 %v76, %v75
  %v86 = vpack.c.b16 %v78, %v77
  %95 = vmatprep.subr.bf16.mxu0 0
  %96 = vmatpush1.bf16.msra.mxu0 %v86
  %97 = vmatprep.subr.bf16.mxu0 0
  %98 = vmatpush1.bf16.msra.mxu0 %v85
  %99 = vmatprep.subr.bf16.mxu0 0
  %100 = vmatpush1.bf16.msra.mxu0 %v84
  %101 = vmatprep.subr.bf16.mxu0 0
  %102 = vmatpush1.bf16.msra.mxu0 %v83
  %103 = vmatprep.subr.bf16.mxu0 0
  %104 = vmatpush1.bf16.msra.mxu0 %v82
  %105 = vmatprep.subr.bf16.mxu0 0
  %106 = vmatpush1.bf16.msra.mxu0 %v81
  %107 = vmatprep.subr.bf16.mxu0 0
  %108 = vmatpush1.bf16.msra.mxu0 %v80
  %109 = vmatprep.subr.bf16.mxu0 0
  %110 = vmatpush1.bf16.msra.mxu0 %v79
  %111 = vmatprep.subr.bf16.mxu0 0
  %112 = vmatpush2.bf16.msra.mxu0 0
  %113 = vmatprep.subr.bf16.mxu0 0
  %114 = vmatpush2.bf16.msra.mxu0 0
  %115 = vmatprep.subr.bf16.mxu0 0
  %116 = vmatpush2.bf16.msra.mxu0 0
  %117 = vmatprep.subr.bf16.mxu0 0
  %118 = vmatpush2.bf16.msra.mxu0 0
  %119 = vmatprep.subr.bf16.mxu0 0
  %120 = vmatpush2.bf16.msra.mxu0 0
  %121 = vmatprep.subr.bf16.mxu0 0
  %122 = vmatpush2.bf16.msra.mxu0 0
  %123 = vmatprep.subr.bf16.mxu0 0
  %124 = vmatpush2.bf16.msra.mxu0 0
  %125 = vmatprep.subr.bf16.mxu0 0
  %126 = vmatpush2.bf16.msra.mxu0 0
  %127 = vmatprep.mubr.bf16.mxu0 0
  %128 = vmatmul.mubr.bf16.gmra.mxu0 %v45
  %v129 = vpop.f32.mrf.mxu0
  %v130 = vadd.f32 0.0, %v129
  %v131 = vpop.f32.mrf.mxu0
  %v132 = vpop.f32.mrf.mxu0
  %v133 = vadd.f32 0.0, %v132
  %v134 = vpop.f32.mrf.mxu0
  %135 = vdwg.mxu0
  %v136 = vadd.f32 %v21, %v130
  %v137 = vadd.f32 %v22, %v133
  %138 = vst [vmem:[#allocation2] sm:$0xff] %v136
  %139 = vst [vmem:[#allocation2 + $0x8] sm:$0xff] %v137
  // Predicated region
  $region18: #{_prompt_bert_core.23} parent=0 // pred_check
    %p140 = pneg %p15
  $region19: #{_prompt_bert_core.23} parent=0 // pred_check_branch
    %142 = sbr.rel (%p140) target = $region21
  $region20: #{_prompt_bert_core.23} parent=0 // pred_region
    %v143 = vld [vmem:[#allocation2] sm:$0xff]
    %v144 = vld [vmem:[#allocation2 + $0x8] sm:$0xff]
    %v145 = vld [vmem:[%s2] sm:$0x1]
    %v147 = vlaneseq
    %v148 = vshrl.u32 %v147, 7
    %v149 = vsub.s32 0, %v148
    %v150 = vrot.slane %v145, %v149
    %v152 = vadd.f32 %v143, %v150
    %v153 = vadd.f32 %v144, %v150
    %v154 = vmul.f32 %v152, %v152
    %v155 = vmul.f32 %v153, %v153
    %v156 = vmul.f32 %v152, %v154
    %v157 = vmul.f32 %v153, %v155
    %v158 = vmul.f32 %v156, 0.044715
    %v159 = vmul.f32 %v157, 0.044715
    %v160 = vadd.f32 %v152, %v158
    %v161 = vadd.f32 %v153, %v159
    %v162 = vmul.f32 %v160, 0.7978846
    %v163 = vmul.f32 %v161, 0.7978846
    %v164 = vtanh.pop %v162
    %v165 = vtanh.pop %v163
    %v166 = vadd.f32 %v164, 1.0
    %v167 = vadd.f32 %v165, 1.0
    %v168 = vmul.f32 %v166, 0.5
    %v169 = vmul.f32 %v167, 0.5
    %v170 = vmul.f32 %v152, %v168
    %v171 = vmul.f32 %v153, %v169
    %v172 = vpack.c.bf16 %v171, %v170
    %v174 = vunpack.c.l.b16 %v172
    %v175 = vunpack.c.h.b16 %v172
    %v176 = vpack.c.b16 %v174, %v174
    %v177 = vpack.c.b16 %v175, %v175
    %180 = vst [vmem:[%s3] sm:$0xf] %v176
    %181 = vst [vmem:[%s3 + $0x4] sm:$0xf] %v177
  $region21: #{_prompt_bert_core.23} parent=0 // pred_fallthru
    _
  // Predicated region
  $region22: #{_prompt_bert_core.23} parent=0 // pred_check
    _
  $region23: #{_prompt_bert_core.23} parent=0 // pred_check_branch
    %183 = sbr.rel (0) target = $region25
  $region24: #{_prompt_bert_core.23} parent=0 // pred_region
    _
  $region25: #{_prompt_bert_core.23} parent=0 // pred_fallthru
    _
  // Predicated region
  $region26: #{_prompt_bert_core.23} parent=0 // pred_check
    _
  $region27: #{_prompt_bert_core.23} parent=0 // pred_check_branch
    %185 = sbr.rel (0) target = $region29
  $region28: #{_prompt_bert_core.23} parent=0 // pred_region
    _
  $region29: #{_prompt_bert_core.23} parent=0 // pred_fallthru
    _

// kernel: _prompt_bert_core.34
$region0: #{_prompt_bert_core.34}
  #allocation0 [shape = 'u32[]', space=smem, size = 0x4, offset = 0x4, fixed_abs, tag = 'smem constant byte address 0x4 - core index']
  #allocation1 [shape = 'u32[144,128]{1,0:T(1,128)}', space=vmem, size = 0x12000, scoped, tag = 'internal scratch']
  %s0 = inlined_call_operand.vmem [shape: bf16[8,32], index: 0, kind: input, shape index: {}]
  %s1 = inlined_call_operand.vmem [shape: f32[1,32], index: 1, kind: input, shape index: {}]
  %s2 = inlined_call_operand.vmem [shape: f32[1,32], index: 2, kind: input, shape index: {}]
  %s3 = inlined_call_operand.vmem [shape: bf16[8,32], index: 3, kind: output, shape index: {}]
  %s4 = sld [smem:[#allocation0]]
  $region22: #{_prompt_bert_core.34} parent=0
    _
  %s6 = ssub.s32 1, %s4
  %s7 = scalar_select 0, %s6, %s4
  // Predicated region
  $region2: #{_prompt_bert_core.34} parent=0 // pred_check
    _
  $region3: #{_prompt_bert_core.34} parent=0 // pred_check_branch
    %9 = sbr.rel (0) target = $region5
  $region4: #{_prompt_bert_core.34} parent=0 // pred_region
    _
  $region5: #{_prompt_bert_core.34} parent=0 // pred_fallthru
    _
  // Predicated region
  $region6: #{_prompt_bert_core.34} parent=0 // pred_check
    _
  $region7: #{_prompt_bert_core.34} parent=0 // pred_check_branch
    %11 = sbr.rel (0) target = $region9
  $region8: #{_prompt_bert_core.34} parent=0 // pred_region
    _
  $region9: #{_prompt_bert_core.34} parent=0 // pred_fallthru
    _
  // Predicated region
  $region10: #{_prompt_bert_core.34} parent=0 // pred_check
    _
  $region11: #{_prompt_bert_core.34} parent=0 // pred_check_branch
    %13 = sbr.rel (0) target = $region13
  $region12: #{_prompt_bert_core.34} parent=0 // pred_region
    _
  $region13: #{_prompt_bert_core.34} parent=0 // pred_fallthru
    _
  %v14 = vld [vmem:[%s0] sm:$0xf]
  %v15 = vunpack.c.l.bf16 %v14
  %vm16 = vcmask 261120
  %v17 = vsel %vm16, %v15, 0.0
  %18 = vadd.xlane.f32.xlu0 %v17
  %v19 = vpop.xlane.xlu0 %18
  %v20 = vrcp.pop 32.0
  %v21 = vmul.f32 %v19, %v20
  %v22 = vsub.f32 %v15, %v21
  %v23 = vmul.f32 %v22, %v22
  %v24 = vsel %vm16, %v23, 0.0
  %25 = vadd.xlane.f32.xlu0 %v24
  %v26 = vpop.xlane.xlu0 %25
  %v27 = vmul.f32 %v26, %v20
  %v28 = vadd.f32 %v27, 1e-12
  %v29 = vrsqrt.pop %v28
  %v30 = vmul.f32 %v22, %v29
  %v31 = vld [vmem:[%s1] sm:$0x1]
  %v33 = vlaneseq
  %v34 = vshrl.u32 %v33, 7
  %v35 = vsub.s32 0, %v34
  %v36 = vrot.slane %v31, %v35
  %v38 = vmul.f32 %v30, %v36
  %v39 = vld [vmem:[%s2] sm:$0x1]
  %v41 = vlaneseq
  %v42 = vshrl.u32 %v41, 7
  %v43 = vsub.s32 0, %v42
  %v44 = vrot.slane %v39, %v43
  %v46 = vadd.f32 %v38, %v44
  %v47 = vpack.c.bf16 %v46, %v46
  %vm48 = vcmask 257024
  %49 = vst.msk [vmem:[%s3] sm:$0xf] %vm48, %v47
  // Predicated region
  $region14: #{_prompt_bert_core.34} parent=0 // pred_check
    _
  $region15: #{_prompt_bert_core.34} parent=0 // pred_check_branch
    %51 = sbr.rel (0) target = $region17
  $region16: #{_prompt_bert_core.34} parent=0 // pred_region
    _
  $region17: #{_prompt_bert_core.34} parent=0 // pred_fallthru
    _
  // Predicated region
  $region18: #{_prompt_bert_core.34} parent=0 // pred_check
    _
  $region19: #{_prompt_bert_core.34} parent=0 // pred_check_branch
    %53 = sbr.rel (0) target = $region21
  $region20: #{_prompt_bert_core.34} parent=0 // pred_region
    _
  $region21: #{_prompt_bert_core.34} parent=0 // pred_fallthru
    _

// kernel: _prompt_bert_core.33
$region0: #{_prompt_bert_core.33}
  #allocation0 [shape = 'u32[]', space=smem, size = 0x4, offset = 0x4, fixed_abs, tag = 'smem constant byte address 0x4 - core index']
  #allocation1 [shape = 'u32[144,128]{1,0:T(1,128)}', space=vmem, size = 0x12000, scoped, tag = 'internal scratch']
  #allocation2 [shape = 'f32[8,128]{1,0:T(8,128)}', space=vmem, size = 0x1000, scoped, tag = 'scratch operand']
  %s0 = inlined_call_operand.vmem [shape: bf16[8,128], index: 0, kind: input, shape index: {}]
  %s1 = inlined_call_operand.vmem [shape: bf16[128,128], index: 1, kind: input, shape index: {}]
  %s2 = inlined_call_operand.vmem [shape: f32[1,128], index: 2, kind: input, shape index: {}]
  %s3 = inlined_call_operand.vmem [shape: bf16[8,128], index: 3, kind: output, shape index: {}]
  %s4 = sld [smem:[#allocation0]]
  $region30: #{_prompt_bert_core.33} parent=0
    _
  %s6 = ssub.s32 1, %s4
  %s7 = scalar_select 0, %s6, %s4
  // Predicated region
  $region2: #{_prompt_bert_core.33} parent=0 // pred_check
    _
  $region3: #{_prompt_bert_core.33} parent=0 // pred_check_branch
    %9 = sbr.rel (0) target = $region5
  $region4: #{_prompt_bert_core.33} parent=0 // pred_region
    _
  $region5: #{_prompt_bert_core.33} parent=0 // pred_fallthru
    _
  // Predicated region
  $region6: #{_prompt_bert_core.33} parent=0 // pred_check
    _
  $region7: #{_prompt_bert_core.33} parent=0 // pred_check_branch
    %11 = sbr.rel (0) target = $region9
  $region8: #{_prompt_bert_core.33} parent=0 // pred_region
    _
  $region9: #{_prompt_bert_core.33} parent=0 // pred_fallthru
    _
  // Predicated region
  $region10: #{_prompt_bert_core.33} parent=0 // pred_check
    _
  $region11: #{_prompt_bert_core.33} parent=0 // pred_check_branch
    %13 = sbr.rel (0) target = $region13
  $region12: #{_prompt_bert_core.33} parent=0 // pred_region
    _
  $region13: #{_prompt_bert_core.33} parent=0 // pred_fallthru
    _
  %p15 = scmp.eq.s32.totalorder 0, 0
  // Predicated region
  $region14: #{_prompt_bert_core.33} parent=0 // pred_check
    %p16 = pneg %p15
  $region15: #{_prompt_bert_core.33} parent=0 // pred_check_branch
    %18 = sbr.rel (%p16) target = $region17
  $region16: #{_prompt_bert_core.33} parent=0 // pred_region
    %19 = vst [vmem:[#allocation2] sm:$0xff] 0.0
  $region17: #{_prompt_bert_core.33} parent=0 // pred_fallthru
    _
  %v20 = vld [vmem:[#allocation2] sm:$0xff]
  %v21 = vld [vmem:[%s0] sm:$0xf]
  %v22 = vld [vmem:[%s1] sm:$0xf]
  %v23 = vld [vmem:[%s1 + $0x4] sm:$0xf]
  %v24 = vld [vmem:[%s1 + $0x8] sm:$0xf]
  %v25 = vld [vmem:[%s1 + $0xc] sm:$0xf]
  %v26 = vld [vmem:[%s1 + $0x10] sm:$0xf]
  %v27 = vld [vmem:[%s1 + $0x14] sm:$0xf]
  %v28 = vld [vmem:[%s1 + $0x18] sm:$0xf]
  %v29 = vld [vmem:[%s1 + $0x1c] sm:$0xf]
  %v30 = vld [vmem:[%s1 + $0x20] sm:$0xf]
  %v31 = vld [vmem:[%s1 + $0x24] sm:$0xf]
  %v32 = vld [vmem:[%s1 + $0x28] sm:$0xf]
  %v33 = vld [vmem:[%s1 + $0x2c] sm:$0xf]
  %v34 = vld [vmem:[%s1 + $0x30] sm:$0xf]
  %v35 = vld [vmem:[%s1 + $0x34] sm:$0xf]
  %v36 = vld [vmem:[%s1 + $0x38] sm:$0xf]
  %v37 = vld [vmem:[%s1 + $0x3c] sm:$0xf]
  %v54 = vunpack.c.l.b16 %v22
  %v55 = vunpack.c.l.b16 %v23
  %v56 = vunpack.c.l.b16 %v24
  %v57 = vunpack.c.l.b16 %v25
  %v58 = vunpack.c.l.b16 %v26
  %v59 = vunpack.c.l.b16 %v27
  %v60 = vunpack.c.l.b16 %v28
  %v61 = vunpack.c.l.b16 %v29
  %v62 = vunpack.c.l.b16 %v30
  %v63 = vunpack.c.l.b16 %v31
  %v64 = vunpack.c.l.b16 %v32
  %v65 = vunpack.c.l.b16 %v33
  %v66 = vunpack.c.l.b16 %v34
  %v67 = vunpack.c.l.b16 %v35
  %v68 = vunpack.c.l.b16 %v36
  %v69 = vunpack.c.l.b16 %v37
  %v70 = vpack.c.b16 %v55, %v54
  %v71 = vpack.c.b16 %v57, %v56
  %v72 = vpack.c.b16 %v59, %v58
  %v73 = vpack.c.b16 %v61, %v60
  %v74 = vpack.c.b16 %v63, %v62
  %v75 = vpack.c.b16 %v65, %v64
  %v76 = vpack.c.b16 %v67, %v66
  %v77 = vpack.c.b16 %v69, %v68
  %86 = vmatprep.subr.bf16.mxu0 0
  %87 = vmatpush1.bf16.msra.mxu0 %v77
  %88 = vmatprep.subr.bf16.mxu0 0
  %89 = vmatpush1.bf16.msra.mxu0 %v76
  %90 = vmatprep.subr.bf16.mxu0 0
  %91 = vmatpush1.bf16.msra.mxu0 %v75
  %92 = vmatprep.subr.bf16.mxu0 0
  %93 = vmatpush1.bf16.msra.mxu0 %v74
  %94 = vmatprep.subr.bf16.mxu0 0
  %95 = vmatpush1.bf16.msra.mxu0 %v73
  %96 = vmatprep.subr.bf16.mxu0 0
  %97 = vmatpush1.bf16.msra.mxu0 %v72
  %98 = vmatprep.subr.bf16.mxu0 0
  %99 = vmatpush1.bf16.msra.mxu0 %v71
  %100 = vmatprep.subr.bf16.mxu0 0
  %101 = vmatpush1.bf16.msra.mxu0 %v70
  %102 = vmatprep.subr.bf16.mxu0 0
  %103 = vmatpush2.bf16.msra.mxu0 0
  %104 = vmatprep.subr.bf16.mxu0 0
  %105 = vmatpush2.bf16.msra.mxu0 0
  %106 = vmatprep.subr.bf16.mxu0 0
  %107 = vmatpush2.bf16.msra.mxu0 0
  %108 = vmatprep.subr.bf16.mxu0 0
  %109 = vmatpush2.bf16.msra.mxu0 0
  %110 = vmatprep.subr.bf16.mxu0 0
  %111 = vmatpush2.bf16.msra.mxu0 0
  %112 = vmatprep.subr.bf16.mxu0 0
  %113 = vmatpush2.bf16.msra.mxu0 0
  %114 = vmatprep.subr.bf16.mxu0 0
  %115 = vmatpush2.bf16.msra.mxu0 0
  %116 = vmatprep.subr.bf16.mxu0 0
  %117 = vmatpush2.bf16.msra.mxu0 0
  %118 = vmatprep.mubr.bf16.mxu0 0
  %119 = vmatmul.mubr.bf16.gmra.mxu0 %v21
  %v120 = vpop.f32.mrf.mxu0
  %v121 = vadd.f32 0.0, %v120
  %v122 = vpop.f32.mrf.mxu0
  %v123 = vpop.f32.mrf.mxu0
  %v124 = vpop.f32.mrf.mxu0
  %125 = vdwg.mxu0
  %v126 = vadd.f32 %v20, %v121
  %127 = vst [vmem:[#allocation2] sm:$0xff] %v126
  // Predicated region
  $region18: #{_prompt_bert_core.33} parent=0 // pred_check
    %p128 = pneg %p15
  $region19: #{_prompt_bert_core.33} parent=0 // pred_check_branch
    %130 = sbr.rel (%p128) target = $region21
  $region20: #{_prompt_bert_core.33} parent=0 // pred_region
    %v131 = vld [vmem:[#allocation2] sm:$0xff]
    %v132 = vld [vmem:[%s2] sm:$0x1]
    %v134 = vlaneseq
    %v135 = vshrl.u32 %v134, 7
    %v136 = vsub.s32 0, %v135
    %v137 = vrot.slane %v132, %v136
    %v139 = vadd.f32 %v131, %v137
    %v140 = vmul.f32 %v139, %v139
    %v141 = vmul.f32 %v139, %v140
    %v142 = vmul.f32 %v141, 0.044715
    %v143 = vadd.f32 %v139, %v142
    %v144 = vmul.f32 %v143, 0.7978846
    %v145 = vtanh.pop %v144
    %v146 = vadd.f32 %v145, 1.0
    %v147 = vmul.f32 %v146, 0.5
    %v148 = vmul.f32 %v139, %v147
    %v149 = vpack.c.bf16 %v148, %v148
    %150 = vst [vmem:[%s3] sm:$0xf] %v149
  $region21: #{_prompt_bert_core.33} parent=0 // pred_fallthru
    _
  // Predicated region
  $region22: #{_prompt_bert_core.33} parent=0 // pred_check
    _
  $region23: #{_prompt_bert_core.33} parent=0 // pred_check_branch
    %152 = sbr.rel (0) target = $region25
  $region24: #{_prompt_bert_core.33} parent=0 // pred_region
    _
  $region25: #{_prompt_bert_core.33} parent=0 // pred_fallthru
    _
  // Predicated region
  $region26: #{_prompt_bert_core.33} parent=0 // pred_check
    _
  $region27: #{_prompt_bert_core.33} parent=0 // pred_check_branch
    %154 = sbr.rel (0) target = $region29
  $region28: #{_prompt_bert_core.33} parent=0 // pred_region
    _
  $region29: #{_prompt_bert_core.33} parent=0 // pred_fallthru
    _

// kernel: _prompt_bert_core.35
$region0: #{_prompt_bert_core.35}
  #allocation0 [shape = 'u32[]', space=smem, size = 0x4, offset = 0x4, fixed_abs, tag = 'smem constant byte address 0x4 - core index']
  #allocation1 [shape = 'u32[144,128]{1,0:T(1,128)}', space=vmem, size = 0x12000, scoped, tag = 'internal scratch']
  #allocation2 [shape = 'f32[8,128]{1,0:T(8,128)}', space=vmem, size = 0x1000, scoped, tag = 'scratch operand']
  %s0 = inlined_call_operand.vmem [shape: bf16[8,128], index: 0, kind: input, shape index: {}]
  %s1 = inlined_call_operand.vmem [shape: bf16[128,128], index: 1, kind: input, shape index: {}]
  %s2 = inlined_call_operand.vmem [shape: f32[1,128], index: 2, kind: input, shape index: {}]
  %s3 = inlined_call_operand.vmem [shape: f32[8,128], index: 3, kind: output, shape index: {}]
  %s4 = sld [smem:[#allocation0]]
  $region30: #{_prompt_bert_core.35} parent=0
    _
  %s6 = ssub.s32 1, %s4
  %s7 = scalar_select 0, %s6, %s4
  // Predicated region
  $region2: #{_prompt_bert_core.35} parent=0 // pred_check
    _
  $region3: #{_prompt_bert_core.35} parent=0 // pred_check_branch
    %9 = sbr.rel (0) target = $region5
  $region4: #{_prompt_bert_core.35} parent=0 // pred_region
    _
  $region5: #{_prompt_bert_core.35} parent=0 // pred_fallthru
    _
  // Predicated region
  $region6: #{_prompt_bert_core.35} parent=0 // pred_check
    _
  $region7: #{_prompt_bert_core.35} parent=0 // pred_check_branch
    %11 = sbr.rel (0) target = $region9
  $region8: #{_prompt_bert_core.35} parent=0 // pred_region
    _
  $region9: #{_prompt_bert_core.35} parent=0 // pred_fallthru
    _
  // Predicated region
  $region10: #{_prompt_bert_core.35} parent=0 // pred_check
    _
  $region11: #{_prompt_bert_core.35} parent=0 // pred_check_branch
    %13 = sbr.rel (0) target = $region13
  $region12: #{_prompt_bert_core.35} parent=0 // pred_region
    _
  $region13: #{_prompt_bert_core.35} parent=0 // pred_fallthru
    _
  %p15 = scmp.eq.s32.totalorder 0, 0
  // Predicated region
  $region14: #{_prompt_bert_core.35} parent=0 // pred_check
    %p16 = pneg %p15
  $region15: #{_prompt_bert_core.35} parent=0 // pred_check_branch
    %18 = sbr.rel (%p16) target = $region17
  $region16: #{_prompt_bert_core.35} parent=0 // pred_region
    %19 = vst [vmem:[#allocation2] sm:$0xff] 0.0
  $region17: #{_prompt_bert_core.35} parent=0 // pred_fallthru
    _
  %v20 = vld [vmem:[#allocation2] sm:$0xff]
  %v21 = vld [vmem:[%s0] sm:$0xf]
  %v22 = vld [vmem:[%s1] sm:$0xf]
  %v23 = vld [vmem:[%s1 + $0x4] sm:$0xf]
  %v24 = vld [vmem:[%s1 + $0x8] sm:$0xf]
  %v25 = vld [vmem:[%s1 + $0xc] sm:$0xf]
  %v26 = vld [vmem:[%s1 + $0x10] sm:$0xf]
  %v27 = vld [vmem:[%s1 + $0x14] sm:$0xf]
  %v28 = vld [vmem:[%s1 + $0x18] sm:$0xf]
  %v29 = vld [vmem:[%s1 + $0x1c] sm:$0xf]
  %v30 = vld [vmem:[%s1 + $0x20] sm:$0xf]
  %v31 = vld [vmem:[%s1 + $0x24] sm:$0xf]
  %v32 = vld [vmem:[%s1 + $0x28] sm:$0xf]
  %v33 = vld [vmem:[%s1 + $0x2c] sm:$0xf]
  %v34 = vld [vmem:[%s1 + $0x30] sm:$0xf]
  %v35 = vld [vmem:[%s1 + $0x34] sm:$0xf]
  %v36 = vld [vmem:[%s1 + $0x38] sm:$0xf]
  %v37 = vld [vmem:[%s1 + $0x3c] sm:$0xf]
  %v54 = vunpack.c.l.b16 %v22
  %v55 = vunpack.c.l.b16 %v23
  %v56 = vunpack.c.l.b16 %v24
  %v57 = vunpack.c.l.b16 %v25
  %v58 = vunpack.c.l.b16 %v26
  %v59 = vunpack.c.l.b16 %v27
  %v60 = vunpack.c.l.b16 %v28
  %v61 = vunpack.c.l.b16 %v29
  %v62 = vunpack.c.l.b16 %v30
  %v63 = vunpack.c.l.b16 %v31
  %v64 = vunpack.c.l.b16 %v32
  %v65 = vunpack.c.l.b16 %v33
  %v66 = vunpack.c.l.b16 %v34
  %v67 = vunpack.c.l.b16 %v35
  %v68 = vunpack.c.l.b16 %v36
  %v69 = vunpack.c.l.b16 %v37
  %v70 = vpack.c.b16 %v55, %v54
  %v71 = vpack.c.b16 %v57, %v56
  %v72 = vpack.c.b16 %v59, %v58
  %v73 = vpack.c.b16 %v61, %v60
  %v74 = vpack.c.b16 %v63, %v62
  %v75 = vpack.c.b16 %v65, %v64
  %v76 = vpack.c.b16 %v67, %v66
  %v77 = vpack.c.b16 %v69, %v68
  %86 = vmatprep.subr.bf16.mxu0 0
  %87 = vmatpush1.bf16.msra.mxu0 %v77
  %88 = vmatprep.subr.bf16.mxu0 0
  %89 = vmatpush1.bf16.msra.mxu0 %v76
  %90 = vmatprep.subr.bf16.mxu0 0
  %91 = vmatpush1.bf16.msra.mxu0 %v75
  %92 = vmatprep.subr.bf16.mxu0 0
  %93 = vmatpush1.bf16.msra.mxu0 %v74
  %94 = vmatprep.subr.bf16.mxu0 0
  %95 = vmatpush1.bf16.msra.mxu0 %v73
  %96 = vmatprep.subr.bf16.mxu0 0
  %97 = vmatpush1.bf16.msra.mxu0 %v72
  %98 = vmatprep.subr.bf16.mxu0 0
  %99 = vmatpush1.bf16.msra.mxu0 %v71
  %100 = vmatprep.subr.bf16.mxu0 0
  %101 = vmatpush1.bf16.msra.mxu0 %v70
  %102 = vmatprep.subr.bf16.mxu0 0
  %103 = vmatpush2.bf16.msra.mxu0 0
  %104 = vmatprep.subr.bf16.mxu0 0
  %105 = vmatpush2.bf16.msra.mxu0 0
  %106 = vmatprep.subr.bf16.mxu0 0
  %107 = vmatpush2.bf16.msra.mxu0 0
  %108 = vmatprep.subr.bf16.mxu0 0
  %109 = vmatpush2.bf16.msra.mxu0 0
  %110 = vmatprep.subr.bf16.mxu0 0
  %111 = vmatpush2.bf16.msra.mxu0 0
  %112 = vmatprep.subr.bf16.mxu0 0
  %113 = vmatpush2.bf16.msra.mxu0 0
  %114 = vmatprep.subr.bf16.mxu0 0
  %115 = vmatpush2.bf16.msra.mxu0 0
  %116 = vmatprep.subr.bf16.mxu0 0
  %117 = vmatpush2.bf16.msra.mxu0 0
  %118 = vmatprep.mubr.bf16.mxu0 0
  %119 = vmatmul.mubr.bf16.gmra.mxu0 %v21
  %v120 = vpop.f32.mrf.mxu0
  %v121 = vadd.f32 0.0, %v120
  %v122 = vpop.f32.mrf.mxu0
  %v123 = vpop.f32.mrf.mxu0
  %v124 = vpop.f32.mrf.mxu0
  %125 = vdwg.mxu0
  %v126 = vadd.f32 %v20, %v121
  %127 = vst [vmem:[#allocation2] sm:$0xff] %v126
  // Predicated region
  $region18: #{_prompt_bert_core.35} parent=0 // pred_check
    %p128 = pneg %p15
  $region19: #{_prompt_bert_core.35} parent=0 // pred_check_branch
    %130 = sbr.rel (%p128) target = $region21
  $region20: #{_prompt_bert_core.35} parent=0 // pred_region
    %v131 = vld [vmem:[#allocation2] sm:$0xff]
    %v132 = vld [vmem:[%s2] sm:$0x1]
    %v134 = vlaneseq
    %v135 = vshrl.u32 %v134, 7
    %v136 = vsub.s32 0, %v135
    %v137 = vrot.slane %v132, %v136
    %v139 = vadd.f32 %v131, %v137
    %140 = vst [vmem:[%s3] sm:$0xff] %v139
  $region21: #{_prompt_bert_core.35} parent=0 // pred_fallthru
    _
  // Predicated region
  $region22: #{_prompt_bert_core.35} parent=0 // pred_check
    _
  $region23: #{_prompt_bert_core.35} parent=0 // pred_check_branch
    %142 = sbr.rel (0) target = $region25
  $region24: #{_prompt_bert_core.35} parent=0 // pred_region
    _
  $region25: #{_prompt_bert_core.35} parent=0 // pred_fallthru
    _
  // Predicated region
  $region26: #{_prompt_bert_core.35} parent=0 // pred_check
    _
  $region27: #{_prompt_bert_core.35} parent=0 // pred_check_branch
    %144 = sbr.rel (0) target = $region29
  $region28: #{_prompt_bert_core.35} parent=0 // pred_region
    _
  $region29: #{_prompt_bert_core.35} parent=0 // pred_fallthru
    _

</llo_original>
